<compile_context>
chip_gen: v7x
topology: tpu7x:2x2x1
jax: 0.10.0
libtpu: 0.0.40
codegen_flags: <defaults>
</compile_context>

<pallas_src>
import functools

import jax
import jax.numpy as jnp
from jax.experimental import pallas as pl
from jax.experimental.pallas import tpu as pltpu

_LANES = 128


def _round_up(x: int, m: int) -> int:
    return ((x + m - 1) // m) * m


def _vmem_budget_bytes() -> int:
    """Per-operand block budget, gated on the chip's real VMEM capacity
    (v7x: 64 MiB physical vs 128 MiB on v5e/v6e)."""
    try:
        cap = pltpu.get_tpu_info().vmem_capacity_bytes
    except Exception:
        cap = 64 * 1024 * 1024
    return (2 if cap >= 100 * 1024 * 1024 else 1) * 1024 * 1024


def _pick_tbr(n_rows: int, d: int, itemsize: int, tb=None) -> int:
    """Rows (of 128 batch elements each) per grid step."""
    if tb is not None:
        assert tb % _LANES == 0, "tb must be a multiple of 128"
        tbr = max(1, tb // _LANES)
    else:
        row_bytes = _LANES * d * itemsize
        tbr = (_vmem_budget_bytes() // row_bytes) // 8 * 8
        tbr = min(max(tbr, 8), 256)
    tbr = _round_up(max(tbr, 1), 8)            # sublane-aligned blocks
    tbr = min(tbr, _round_up(n_rows, 8))       # don't over-pad small batches
    # Keep >= 2 balanced tiles when there's enough work so v7x megacore can
    # split the batch across both TensorCores (no-op on v5e/v6e).
    if _round_up(n_rows, 8) >= 16:
        tbr = min(tbr, _round_up(-(-n_rows // 2), 8))
    return tbr


def _puremf_fwd_kernel(u_ref, v_ref, seg_ref, o_ref):
    # u_ref, v_ref: (tbr, 128*D) lane-dense blocks (bf16 or f32).
    # seg_ref: (128*D, 128) constant 0/1 segment-sum matrix, resident.
    # o_ref: (tbr, 128) f32, lane-dense scores.
    prod = u_ref[...].astype(jnp.float32) * v_ref[...].astype(jnp.float32)
    # Per-example sum over D on the (idle) MXU; output is natively lane-dense.
    scores = jnp.dot(prod, seg_ref[...], preferred_element_type=jnp.float32)
    # sigmoid: exp lands on the EUP slot, divide on the VPU — both have slack.
    o_ref[...] = 1.0 / (1.0 + jnp.exp(-scores))


@functools.partial(jax.jit, static_argnames=("tb",))
def puremf_forward(user_table, item_table, users, items, *, tb=None):
    """Pallas implementation of PureMF.forward.

    user_table: (num_users, D) embedding weights (f32 or bf16)
    item_table: (num_items, D) embedding weights (same dtype)
    users, items: (B,) integer index vectors
    returns: (B,) f32 sigmoid(sum(u_emb * i_emb, axis=1))
    """
    assert user_table.shape[1] == item_table.shape[1]
    assert user_table.dtype == item_table.dtype
    users = users.astype(jnp.int32)
    items = items.astype(jnp.int32)
    B = users.shape[0]
    D = user_table.shape[1]
    itemsize = jnp.dtype(user_table.dtype).itemsize

    R = -(-B // _LANES)                        # rows of 128 batch elements
    tbr = _pick_tbr(R, D, itemsize, tb)
    R_pad = _round_up(R, tbr)
    B_pad = R_pad * _LANES
    if B_pad != B:
        # Pad the cheap index vectors; row 0 is always a valid index and the
        # padded lanes are sliced off below.
        users = jnp.pad(users, (0, B_pad - B))
        items = jnp.pad(items, (0, B_pad - B))

    # XLA row gather (glue), streamed in the tables' storage dtype.  The old
    # explicit transpose is gone: the reshape below is a pure bitcast.
    u = jnp.take(user_table, users, axis=0).reshape(R_pad, _LANES * D)
    v = jnp.take(item_table, items, axis=0).reshape(R_pad, _LANES * D)

    # Constant segment-sum matrix: S[l, j] = 1 iff l // D == j, so
    # (u*v) @ S sums each group of D consecutive lanes into batch slot j.
    lane = jnp.arange(_LANES * D, dtype=jnp.int32)[:, None]
    col = jnp.arange(_LANES, dtype=jnp.int32)[None, :]
    seg = (lane // D == col).astype(jnp.float32)

    num_tiles = R_pad // tbr
    cost = pl.CostEstimate(
        flops=2 * B_pad * _LANES * D + B_pad * D,
        transcendentals=B_pad,
        bytes_accessed=2 * B_pad * D * itemsize + seg.size * 4 + B_pad * 4,
    )

    out = pl.pallas_call(
        _puremf_fwd_kernel,
        out_shape=jax.ShapeDtypeStruct((R_pad, _LANES), jnp.float32),
        grid_spec=pltpu.PrefetchScalarGridSpec(
            num_scalar_prefetch=0,
            grid=(num_tiles,),
            in_specs=[
                pl.BlockSpec((tbr, _LANES * D), lambda i: (i, 0)),
                pl.BlockSpec((tbr, _LANES * D), lambda i: (i, 0)),
                # Constant block index -> DMA'd once per core, stays resident.
                pl.BlockSpec((_LANES * D, _LANES), lambda i: (0, 0)),
            ],
            out_specs=pl.BlockSpec((tbr, _LANES), lambda i: (i, 0)),
        ),
        compiler_params=pltpu.CompilerParams(
            dimension_semantics=("parallel",),
            vmem_limit_bytes=32 * 1024 * 1024,
        ),
        cost_estimate=cost,
    )(u, v, seg)
    return out.reshape(B_pad)[:B]


def puremf_forward_ref(user_table, item_table, users, items):
    u = jnp.take(user_table, users.astype(jnp.int32), axis=0).astype(jnp.float32)
    v = jnp.take(item_table, items.astype(jnp.int32), axis=0).astype(jnp.float32)
    return jax.nn.sigmoid(jnp.sum(u * v, axis=1))


if __name__ == "__main__":
    # Deterministic synthetic parameters / inputs (N(0,1) init, as in PureMF).
    num_users = 32
    num_items = 48
    latent_dim = 32          # config['latent_dim_rec']
    batch = 8

    key = jax.random.PRNGKey(0)
    k_u, k_i, k_u1, k_i1, k_u2, k_i2 = jax.random.split(key, 6)
    user_f32 = jax.random.normal(k_u, (num_users, latent_dim), dtype=jnp.float32)
    item_f32 = jax.random.normal(k_i, (num_items, latent_dim), dtype=jnp.float32)
    # Store / stream the embedding tables in bf16 (review: halve HBM bytes);
    # all in-kernel math stays in f32.
    user_tbl = user_f32.astype(jnp.bfloat16)
    item_tbl = item_f32.astype(jnp.bfloat16)

    users = jax.random.randint(k_u1, (batch,), 0, num_users, dtype=jnp.int32)
    items = jax.random.randint(k_i1, (batch,), 0, num_items, dtype=jnp.int32)
    out = jax.block_until_ready(puremf_forward(user_tbl, item_tbl, users, items))
    ref = puremf_forward_ref(user_tbl, item_tbl, users, items)
    assert out.shape == (batch,)
    # Tolerance covers bf16-stored embeddings and possible bf16 MXU passes in
    # the f32 segment-sum matmul; any structural bug (indexing, segmentation,
    # padding) produces O(0.1)+ errors and would still be caught.
    assert jnp.allclose(out, ref, atol=2e-2, rtol=0.0), (out, ref)

    # Multi-tile grid: non-128-aligned batch with an explicit small tile
    # (exercises padding, >1 grid step, and output slicing).
    batch2 = 3000
    users2 = jax.random.randint(k_u2, (batch2,), 0, num_users, dtype=jnp.int32)
    items2 = jax.random.randint(k_i2, (batch2,), 0, num_items, dtype=jnp.int32)
    out2 = jax.block_until_ready(
        puremf_forward(user_tbl, item_tbl, users2, items2, tb=1024))
    ref2 = puremf_forward_ref(user_tbl, item_tbl, users2, items2)
    assert out2.shape == (batch2,)
    assert jnp.allclose(out2, ref2, atol=2e-2, rtol=0.0)

    # f32-table path (dtype-generic streaming).
    out3 = jax.block_until_ready(puremf_forward(user_f32, item_f32, users, items))
    ref3 = puremf_forward_ref(user_f32, item_f32, users, items)
    assert jnp.allclose(out3, ref3, atol=2e-2, rtol=0.0)

    print("KERNEL_OK")
</pallas_src>

<mosaic_0001>
module attributes {stable_mosaic.version = 11 : i64} {
  func.func @_puremf_fwd_kernel(%arg0: i32, %arg1: memref<8x4096xbf16, #tpu.memory_space<vmem>>, %arg2: memref<8x4096xbf16, #tpu.memory_space<vmem>>, %arg3: memref<4096x128xf32, #tpu.memory_space<vmem>>, %arg4: memref<8x128xf32, #tpu.memory_space<vmem>>) attributes {dimension_semantics = [#tpu.dimension_semantics<parallel>], iteration_bounds = array<i64: 1>, scalar_prefetch = 0 : i64, scratch_operands = 0 : i64, tpu.core_type = #tpu.core_type<tc>, window_params = [{transform_indices = @transform_0, window_bounds = array<i64: 8, 4096>}, {transform_indices = @transform_1, window_bounds = array<i64: 8, 4096>}, {pipeline_mode = #tpu.pipeline_mode<synchronous>, transform_indices = @transform_2, window_bounds = array<i64: 4096, 128>}, {transform_indices = @transform_3, window_bounds = array<i64: 8, 128>}]} {
    %c0 = arith.constant 0 : index
    %c0_0 = arith.constant 0 : index
    %0 = vector.load %arg1[%c0, %c0_0] : memref<8x4096xbf16, #tpu.memory_space<vmem>>, vector<8x4096xbf16>
    %1 = arith.extf %0 : vector<8x4096xbf16> to vector<8x4096xf32>
    %c0_1 = arith.constant 0 : index
    %c0_2 = arith.constant 0 : index
    %2 = vector.load %arg2[%c0_1, %c0_2] : memref<8x4096xbf16, #tpu.memory_space<vmem>>, vector<8x4096xbf16>
    %3 = arith.extf %2 : vector<8x4096xbf16> to vector<8x4096xf32>
    %4 = arith.mulf %1, %3 : vector<8x4096xf32>
    %c0_3 = arith.constant 0 : index
    %c0_4 = arith.constant 0 : index
    %5 = vector.load %arg3[%c0_3, %c0_4] : memref<4096x128xf32, #tpu.memory_space<vmem>>, vector<4096x128xf32>
    %cst = arith.constant dense<0.000000e+00> : vector<8x128xf32>
    %6 = tpu.matmul %4, %5, %cst {dimension_numbers = #tpu.dot_dimension_numbers<[1], [0], [0], [1], [0, 0, 1, 1], [], []>} : vector<8x4096xf32>, vector<4096x128xf32>, vector<8x128xf32> -> vector<8x128xf32>
    %cst_5 = arith.constant 0.000000e+00 : f32
    %7 = vector.broadcast %cst_5 : f32 to vector<8x128xf32>
    %8 = arith.subf %7, %6 : vector<8x128xf32>
    %9 = math.exp %8 : vector<8x128xf32>
    %cst_6 = arith.constant 1.000000e+00 : f32
    %10 = vector.broadcast %cst_6 : f32 to vector<8x128xf32>
    %11 = arith.addf %10, %9 : vector<8x128xf32>
    %cst_7 = arith.constant 1.000000e+00 : f32
    %12 = vector.broadcast %cst_7 : f32 to vector<8x128xf32>
    %13 = arith.divf %12, %11 : vector<8x128xf32>
    %c0_8 = arith.constant 0 : index
    %c0_9 = arith.constant 0 : index
    %14 = vector.load %arg4[%c0_8, %c0_9] : memref<8x128xf32, #tpu.memory_space<vmem>>, vector<8x128xf32>
    tpu.vector_store %arg4[%c0_8, %c0_9], %13 {strides = array<i32>} : memref<8x128xf32, #tpu.memory_space<vmem>>, vector<8x128xf32>,
    return
  }
  func.func @transform_0(%arg0: i32) -> (i32, i32) {
    %c0_i32 = arith.constant 0 : i32
    %c0_i32_0 = arith.constant 0 : i32
    return %arg0, %c0_i32 : i32, i32
  }
  func.func @transform_1(%arg0: i32) -> (i32, i32) {
    %c0_i32 = arith.constant 0 : i32
    %c0_i32_0 = arith.constant 0 : i32
    return %arg0, %c0_i32 : i32, i32
  }
  func.func @transform_2(%arg0: i32) -> (i32, i32) {
    %c0_i32 = arith.constant 0 : i32
    %c0_i32_0 = arith.constant 0 : i32
    %c0_i32_1 = arith.constant 0 : i32
    return %c0_i32, %c0_i32_0 : i32, i32
  }
  func.func @transform_3(%arg0: i32) -> (i32, i32) {
    %c0_i32 = arith.constant 0 : i32
    %c0_i32_0 = arith.constant 0 : i32
    return %arg0, %c0_i32 : i32, i32
  }
}

</mosaic_0001>

<llo_original>
// kernel: puremf_forward.1
$region0: #{puremf_forward.1}
  #allocation0 [shape = 'u32[]', space=smem, size = 0x4, offset = 0x4, fixed_abs, tag = 'smem constant byte address 0x4 - core index']
  #allocation1 [shape = 'u32[144,128]{1,0:T(1,128)}', space=vmem, size = 0x12000, scoped, tag = 'internal scratch']
  %s0 = inlined_call_operand.vmem [shape: bf16[8,4096], index: 0, kind: input, shape index: {}]
  %s1 = inlined_call_operand.vmem [shape: bf16[8,4096], index: 1, kind: input, shape index: {}]
  %s2 = inlined_call_operand.vmem [shape: f32[4096,128], index: 2, kind: input, shape index: {}]
  %s3 = inlined_call_operand.vmem [shape: f32[8,128], index: 3, kind: output, shape index: {}]
  %s4 = sld [smem:[#allocation0]]
  $region22: #{puremf_forward.1} parent=0
    _
  %s6 = ssub.s32 1, %s4
  %s7 = scalar_select 0, %s6, %s4
  // Predicated region
  $region2: #{puremf_forward.1} parent=0 // pred_check
    _
  $region3: #{puremf_forward.1} parent=0 // pred_check_branch
    %9 = sbr.rel (0) target = $region5
  $region4: #{puremf_forward.1} parent=0 // pred_region
    _
  $region5: #{puremf_forward.1} parent=0 // pred_fallthru
    _
  // Predicated region
  $region6: #{puremf_forward.1} parent=0 // pred_check
    _
  $region7: #{puremf_forward.1} parent=0 // pred_check_branch
    %11 = sbr.rel (0) target = $region9
  $region8: #{puremf_forward.1} parent=0 // pred_region
    _
  $region9: #{puremf_forward.1} parent=0 // pred_fallthru
    _
  // Predicated region
  $region10: #{puremf_forward.1} parent=0 // pred_check
    _
  $region11: #{puremf_forward.1} parent=0 // pred_check_branch
    %13 = sbr.rel (0) target = $region13
  $region12: #{puremf_forward.1} parent=0 // pred_region
    _
  $region13: #{puremf_forward.1} parent=0 // pred_fallthru
    _
  %v14 = vld [vmem:[%s0] sm:$0xff]
  %v15 = vld [vmem:[%s0 + $0x8] sm:$0xff]
  %v16 = vld [vmem:[%s0 + $0x10] sm:$0xff]
  %v17 = vld [vmem:[%s0 + $0x18] sm:$0xff]
  %v18 = vld [vmem:[%s0 + $0x20] sm:$0xff]
  %v19 = vld [vmem:[%s0 + $0x28] sm:$0xff]
  %v20 = vld [vmem:[%s0 + $0x30] sm:$0xff]
  %v21 = vld [vmem:[%s0 + $0x38] sm:$0xff]
  %v22 = vld [vmem:[%s0 + $0x40] sm:$0xff]
  %v23 = vld [vmem:[%s0 + $0x48] sm:$0xff]
  %v24 = vld [vmem:[%s0 + $0x50] sm:$0xff]
  %v25 = vld [vmem:[%s0 + $0x58] sm:$0xff]
  %v26 = vld [vmem:[%s0 + $0x60] sm:$0xff]
  %v27 = vld [vmem:[%s0 + $0x68] sm:$0xff]
  %v28 = vld [vmem:[%s0 + $0x70] sm:$0xff]
  %v29 = vld [vmem:[%s0 + $0x78] sm:$0xff]
  %v30 = vunpack.c.l.bf16 %v14
  %v31 = vunpack.c.h.bf16 %v14
  %v32 = vunpack.c.l.bf16 %v15
  %v33 = vunpack.c.h.bf16 %v15
  %v34 = vunpack.c.l.bf16 %v16
  %v35 = vunpack.c.h.bf16 %v16
  %v36 = vunpack.c.l.bf16 %v17
  %v37 = vunpack.c.h.bf16 %v17
  %v38 = vunpack.c.l.bf16 %v18
  %v39 = vunpack.c.h.bf16 %v18
  %v40 = vunpack.c.l.bf16 %v19
  %v41 = vunpack.c.h.bf16 %v19
  %v42 = vunpack.c.l.bf16 %v20
  %v43 = vunpack.c.h.bf16 %v20
  %v44 = vunpack.c.l.bf16 %v21
  %v45 = vunpack.c.h.bf16 %v21
  %v46 = vunpack.c.l.bf16 %v22
  %v47 = vunpack.c.h.bf16 %v22
  %v48 = vunpack.c.l.bf16 %v23
  %v49 = vunpack.c.h.bf16 %v23
  %v50 = vunpack.c.l.bf16 %v24
  %v51 = vunpack.c.h.bf16 %v24
  %v52 = vunpack.c.l.bf16 %v25
  %v53 = vunpack.c.h.bf16 %v25
  %v54 = vunpack.c.l.bf16 %v26
  %v55 = vunpack.c.h.bf16 %v26
  %v56 = vunpack.c.l.bf16 %v27
  %v57 = vunpack.c.h.bf16 %v27
  %v58 = vunpack.c.l.bf16 %v28
  %v59 = vunpack.c.h.bf16 %v28
  %v60 = vunpack.c.l.bf16 %v29
  %v61 = vunpack.c.h.bf16 %v29
  %v62 = vld [vmem:[%s1] sm:$0xff]
  %v63 = vld [vmem:[%s1 + $0x8] sm:$0xff]
  %v64 = vld [vmem:[%s1 + $0x10] sm:$0xff]
  %v65 = vld [vmem:[%s1 + $0x18] sm:$0xff]
  %v66 = vld [vmem:[%s1 + $0x20] sm:$0xff]
  %v67 = vld [vmem:[%s1 + $0x28] sm:$0xff]
  %v68 = vld [vmem:[%s1 + $0x30] sm:$0xff]
  %v69 = vld [vmem:[%s1 + $0x38] sm:$0xff]
  %v70 = vld [vmem:[%s1 + $0x40] sm:$0xff]
  %v71 = vld [vmem:[%s1 + $0x48] sm:$0xff]
  %v72 = vld [vmem:[%s1 + $0x50] sm:$0xff]
  %v73 = vld [vmem:[%s1 + $0x58] sm:$0xff]
  %v74 = vld [vmem:[%s1 + $0x60] sm:$0xff]
  %v75 = vld [vmem:[%s1 + $0x68] sm:$0xff]
  %v76 = vld [vmem:[%s1 + $0x70] sm:$0xff]
  %v77 = vld [vmem:[%s1 + $0x78] sm:$0xff]
  %v78 = vunpack.c.l.bf16 %v62
  %v79 = vunpack.c.h.bf16 %v62
  %v80 = vunpack.c.l.bf16 %v63
  %v81 = vunpack.c.h.bf16 %v63
  %v82 = vunpack.c.l.bf16 %v64
  %v83 = vunpack.c.h.bf16 %v64
  %v84 = vunpack.c.l.bf16 %v65
  %v85 = vunpack.c.h.bf16 %v65
  %v86 = vunpack.c.l.bf16 %v66
  %v87 = vunpack.c.h.bf16 %v66
  %v88 = vunpack.c.l.bf16 %v67
  %v89 = vunpack.c.h.bf16 %v67
  %v90 = vunpack.c.l.bf16 %v68
  %v91 = vunpack.c.h.bf16 %v68
  %v92 = vunpack.c.l.bf16 %v69
  %v93 = vunpack.c.h.bf16 %v69
  %v94 = vunpack.c.l.bf16 %v70
  %v95 = vunpack.c.h.bf16 %v70
  %v96 = vunpack.c.l.bf16 %v71
  %v97 = vunpack.c.h.bf16 %v71
  %v98 = vunpack.c.l.bf16 %v72
  %v99 = vunpack.c.h.bf16 %v72
  %v100 = vunpack.c.l.bf16 %v73
  %v101 = vunpack.c.h.bf16 %v73
  %v102 = vunpack.c.l.bf16 %v74
  %v103 = vunpack.c.h.bf16 %v74
  %v104 = vunpack.c.l.bf16 %v75
  %v105 = vunpack.c.h.bf16 %v75
  %v106 = vunpack.c.l.bf16 %v76
  %v107 = vunpack.c.h.bf16 %v76
  %v108 = vunpack.c.l.bf16 %v77
  %v109 = vunpack.c.h.bf16 %v77
  %v110 = vmul.f32 %v30, %v78
  %v111 = vmul.f32 %v31, %v79
  %v112 = vmul.f32 %v32, %v80
  %v113 = vmul.f32 %v33, %v81
  %v114 = vmul.f32 %v34, %v82
  %v115 = vmul.f32 %v35, %v83
  %v116 = vmul.f32 %v36, %v84
  %v117 = vmul.f32 %v37, %v85
  %v118 = vmul.f32 %v38, %v86
  %v119 = vmul.f32 %v39, %v87
  %v120 = vmul.f32 %v40, %v88
  %v121 = vmul.f32 %v41, %v89
  %v122 = vmul.f32 %v42, %v90
  %v123 = vmul.f32 %v43, %v91
  %v124 = vmul.f32 %v44, %v92
  %v125 = vmul.f32 %v45, %v93
  %v126 = vmul.f32 %v46, %v94
  %v127 = vmul.f32 %v47, %v95
  %v128 = vmul.f32 %v48, %v96
  %v129 = vmul.f32 %v49, %v97
  %v130 = vmul.f32 %v50, %v98
  %v131 = vmul.f32 %v51, %v99
  %v132 = vmul.f32 %v52, %v100
  %v133 = vmul.f32 %v53, %v101
  %v134 = vmul.f32 %v54, %v102
  %v135 = vmul.f32 %v55, %v103
  %v136 = vmul.f32 %v56, %v104
  %v137 = vmul.f32 %v57, %v105
  %v138 = vmul.f32 %v58, %v106
  %v139 = vmul.f32 %v59, %v107
  %v140 = vmul.f32 %v60, %v108
  %v141 = vmul.f32 %v61, %v109
  %v142 = vld [vmem:[%s2] sm:$0xff]
  %v143 = vld [vmem:[%s2 + $0x8] sm:$0xff]
  %v144 = vld [vmem:[%s2 + $0x10] sm:$0xff]
  %v145 = vld [vmem:[%s2 + $0x18] sm:$0xff]
  %v146 = vld [vmem:[%s2 + $0x20] sm:$0xff]
  %v147 = vld [vmem:[%s2 + $0x28] sm:$0xff]
  %v148 = vld [vmem:[%s2 + $0x30] sm:$0xff]
  %v149 = vld [vmem:[%s2 + $0x38] sm:$0xff]
  %v150 = vld [vmem:[%s2 + $0x40] sm:$0xff]
  %v151 = vld [vmem:[%s2 + $0x48] sm:$0xff]
  %v152 = vld [vmem:[%s2 + $0x50] sm:$0xff]
  %v153 = vld [vmem:[%s2 + $0x58] sm:$0xff]
  %v154 = vld [vmem:[%s2 + $0x60] sm:$0xff]
  %v155 = vld [vmem:[%s2 + $0x68] sm:$0xff]
  %v156 = vld [vmem:[%s2 + $0x70] sm:$0xff]
  %v157 = vld [vmem:[%s2 + $0x78] sm:$0xff]
  %v158 = vld [vmem:[%s2 + $0x80] sm:$0xff]
  %v159 = vld [vmem:[%s2 + $0x88] sm:$0xff]
  %v160 = vld [vmem:[%s2 + $0x90] sm:$0xff]
  %v161 = vld [vmem:[%s2 + $0x98] sm:$0xff]
  %v162 = vld [vmem:[%s2 + $0xa0] sm:$0xff]
  %v163 = vld [vmem:[%s2 + $0xa8] sm:$0xff]
  %v164 = vld [vmem:[%s2 + $0xb0] sm:$0xff]
  %v165 = vld [vmem:[%s2 + $0xb8] sm:$0xff]
  %v166 = vld [vmem:[%s2 + $0xc0] sm:$0xff]
  %v167 = vld [vmem:[%s2 + $0xc8] sm:$0xff]
  %v168 = vld [vmem:[%s2 + $0xd0] sm:$0xff]
  %v169 = vld [vmem:[%s2 + $0xd8] sm:$0xff]
  %v170 = vld [vmem:[%s2 + $0xe0] sm:$0xff]
  %v171 = vld [vmem:[%s2 + $0xe8] sm:$0xff]
  %v172 = vld [vmem:[%s2 + $0xf0] sm:$0xff]
  %v173 = vld [vmem:[%s2 + $0xf8] sm:$0xff]
  %v174 = vld [vmem:[%s2 + $0x100] sm:$0xff]
  %v175 = vld [vmem:[%s2 + $0x108] sm:$0xff]
  %v176 = vld [vmem:[%s2 + $0x110] sm:$0xff]
  %v177 = vld [vmem:[%s2 + $0x118] sm:$0xff]
  %v178 = vld [vmem:[%s2 + $0x120] sm:$0xff]
  %v179 = vld [vmem:[%s2 + $0x128] sm:$0xff]
  %v180 = vld [vmem:[%s2 + $0x130] sm:$0xff]
  %v181 = vld [vmem:[%s2 + $0x138] sm:$0xff]
  %v182 = vld [vmem:[%s2 + $0x140] sm:$0xff]
  %v183 = vld [vmem:[%s2 + $0x148] sm:$0xff]
  %v184 = vld [vmem:[%s2 + $0x150] sm:$0xff]
  %v185 = vld [vmem:[%s2 + $0x158] sm:$0xff]
  %v186 = vld [vmem:[%s2 + $0x160] sm:$0xff]
  %v187 = vld [vmem:[%s2 + $0x168] sm:$0xff]
  %v188 = vld [vmem:[%s2 + $0x170] sm:$0xff]
  %v189 = vld [vmem:[%s2 + $0x178] sm:$0xff]
  %v190 = vld [vmem:[%s2 + $0x180] sm:$0xff]
  %v191 = vld [vmem:[%s2 + $0x188] sm:$0xff]
  %v192 = vld [vmem:[%s2 + $0x190] sm:$0xff]
  %v193 = vld [vmem:[%s2 + $0x198] sm:$0xff]
  %v194 = vld [vmem:[%s2 + $0x1a0] sm:$0xff]
  %v195 = vld [vmem:[%s2 + $0x1a8] sm:$0xff]
  %v196 = vld [vmem:[%s2 + $0x1b0] sm:$0xff]
  %v197 = vld [vmem:[%s2 + $0x1b8] sm:$0xff]
  %v198 = vld [vmem:[%s2 + $0x1c0] sm:$0xff]
  %v199 = vld [vmem:[%s2 + $0x1c8] sm:$0xff]
  %v200 = vld [vmem:[%s2 + $0x1d0] sm:$0xff]
  %v201 = vld [vmem:[%s2 + $0x1d8] sm:$0xff]
  %v202 = vld [vmem:[%s2 + $0x1e0] sm:$0xff]
  %v203 = vld [vmem:[%s2 + $0x1e8] sm:$0xff]
  %v204 = vld [vmem:[%s2 + $0x1f0] sm:$0xff]
  %v205 = vld [vmem:[%s2 + $0x1f8] sm:$0xff]
  %v206 = vld [vmem:[%s2 + $0x200] sm:$0xff]
  %v207 = vld [vmem:[%s2 + $0x208] sm:$0xff]
  %v208 = vld [vmem:[%s2 + $0x210] sm:$0xff]
  %v209 = vld [vmem:[%s2 + $0x218] sm:$0xff]
  %v210 = vld [vmem:[%s2 + $0x220] sm:$0xff]
  %v211 = vld [vmem:[%s2 + $0x228] sm:$0xff]
  %v212 = vld [vmem:[%s2 + $0x230] sm:$0xff]
  %v213 = vld [vmem:[%s2 + $0x238] sm:$0xff]
  %v214 = vld [vmem:[%s2 + $0x240] sm:$0xff]
  %v215 = vld [vmem:[%s2 + $0x248] sm:$0xff]
  %v216 = vld [vmem:[%s2 + $0x250] sm:$0xff]
  %v217 = vld [vmem:[%s2 + $0x258] sm:$0xff]
  %v218 = vld [vmem:[%s2 + $0x260] sm:$0xff]
  %v219 = vld [vmem:[%s2 + $0x268] sm:$0xff]
  %v220 = vld [vmem:[%s2 + $0x270] sm:$0xff]
  %v221 = vld [vmem:[%s2 + $0x278] sm:$0xff]
  %v222 = vld [vmem:[%s2 + $0x280] sm:$0xff]
  %v223 = vld [vmem:[%s2 + $0x288] sm:$0xff]
  %v224 = vld [vmem:[%s2 + $0x290] sm:$0xff]
  %v225 = vld [vmem:[%s2 + $0x298] sm:$0xff]
  %v226 = vld [vmem:[%s2 + $0x2a0] sm:$0xff]
  %v227 = vld [vmem:[%s2 + $0x2a8] sm:$0xff]
  %v228 = vld [vmem:[%s2 + $0x2b0] sm:$0xff]
  %v229 = vld [vmem:[%s2 + $0x2b8] sm:$0xff]
  %v230 = vld [vmem:[%s2 + $0x2c0] sm:$0xff]
  %v231 = vld [vmem:[%s2 + $0x2c8] sm:$0xff]
  %v232 = vld [vmem:[%s2 + $0x2d0] sm:$0xff]
  %v233 = vld [vmem:[%s2 + $0x2d8] sm:$0xff]
  %v234 = vld [vmem:[%s2 + $0x2e0] sm:$0xff]
  %v235 = vld [vmem:[%s2 + $0x2e8] sm:$0xff]
  %v236 = vld [vmem:[%s2 + $0x2f0] sm:$0xff]
  %v237 = vld [vmem:[%s2 + $0x2f8] sm:$0xff]
  %v238 = vld [vmem:[%s2 + $0x300] sm:$0xff]
  %v239 = vld [vmem:[%s2 + $0x308] sm:$0xff]
  %v240 = vld [vmem:[%s2 + $0x310] sm:$0xff]
  %v241 = vld [vmem:[%s2 + $0x318] sm:$0xff]
  %v242 = vld [vmem:[%s2 + $0x320] sm:$0xff]
  %v243 = vld [vmem:[%s2 + $0x328] sm:$0xff]
  %v244 = vld [vmem:[%s2 + $0x330] sm:$0xff]
  %v245 = vld [vmem:[%s2 + $0x338] sm:$0xff]
  %v246 = vld [vmem:[%s2 + $0x340] sm:$0xff]
  %v247 = vld [vmem:[%s2 + $0x348] sm:$0xff]
  %v248 = vld [vmem:[%s2 + $0x350] sm:$0xff]
  %v249 = vld [vmem:[%s2 + $0x358] sm:$0xff]
  %v250 = vld [vmem:[%s2 + $0x360] sm:$0xff]
  %v251 = vld [vmem:[%s2 + $0x368] sm:$0xff]
  %v252 = vld [vmem:[%s2 + $0x370] sm:$0xff]
  %v253 = vld [vmem:[%s2 + $0x378] sm:$0xff]
  %v254 = vld [vmem:[%s2 + $0x380] sm:$0xff]
  %v255 = vld [vmem:[%s2 + $0x388] sm:$0xff]
  %v256 = vld [vmem:[%s2 + $0x390] sm:$0xff]
  %v257 = vld [vmem:[%s2 + $0x398] sm:$0xff]
  %v258 = vld [vmem:[%s2 + $0x3a0] sm:$0xff]
  %v259 = vld [vmem:[%s2 + $0x3a8] sm:$0xff]
  %v260 = vld [vmem:[%s2 + $0x3b0] sm:$0xff]
  %v261 = vld [vmem:[%s2 + $0x3b8] sm:$0xff]
  %v262 = vld [vmem:[%s2 + $0x3c0] sm:$0xff]
  %v263 = vld [vmem:[%s2 + $0x3c8] sm:$0xff]
  %v264 = vld [vmem:[%s2 + $0x3d0] sm:$0xff]
  %v265 = vld [vmem:[%s2 + $0x3d8] sm:$0xff]
  %v266 = vld [vmem:[%s2 + $0x3e0] sm:$0xff]
  %v267 = vld [vmem:[%s2 + $0x3e8] sm:$0xff]
  %v268 = vld [vmem:[%s2 + $0x3f0] sm:$0xff]
  %v269 = vld [vmem:[%s2 + $0x3f8] sm:$0xff]
  %v270 = vld [vmem:[%s2 + $0x400] sm:$0xff]
  %v271 = vld [vmem:[%s2 + $0x408] sm:$0xff]
  %v272 = vld [vmem:[%s2 + $0x410] sm:$0xff]
  %v273 = vld [vmem:[%s2 + $0x418] sm:$0xff]
  %v274 = vld [vmem:[%s2 + $0x420] sm:$0xff]
  %v275 = vld [vmem:[%s2 + $0x428] sm:$0xff]
  %v276 = vld [vmem:[%s2 + $0x430] sm:$0xff]
  %v277 = vld [vmem:[%s2 + $0x438] sm:$0xff]
  %v278 = vld [vmem:[%s2 + $0x440] sm:$0xff]
  %v279 = vld [vmem:[%s2 + $0x448] sm:$0xff]
  %v280 = vld [vmem:[%s2 + $0x450] sm:$0xff]
  %v281 = vld [vmem:[%s2 + $0x458] sm:$0xff]
  %v282 = vld [vmem:[%s2 + $0x460] sm:$0xff]
  %v283 = vld [vmem:[%s2 + $0x468] sm:$0xff]
  %v284 = vld [vmem:[%s2 + $0x470] sm:$0xff]
  %v285 = vld [vmem:[%s2 + $0x478] sm:$0xff]
  %v286 = vld [vmem:[%s2 + $0x480] sm:$0xff]
  %v287 = vld [vmem:[%s2 + $0x488] sm:$0xff]
  %v288 = vld [vmem:[%s2 + $0x490] sm:$0xff]
  %v289 = vld [vmem:[%s2 + $0x498] sm:$0xff]
  %v290 = vld [vmem:[%s2 + $0x4a0] sm:$0xff]
  %v291 = vld [vmem:[%s2 + $0x4a8] sm:$0xff]
  %v292 = vld [vmem:[%s2 + $0x4b0] sm:$0xff]
  %v293 = vld [vmem:[%s2 + $0x4b8] sm:$0xff]
  %v294 = vld [vmem:[%s2 + $0x4c0] sm:$0xff]
  %v295 = vld [vmem:[%s2 + $0x4c8] sm:$0xff]
  %v296 = vld [vmem:[%s2 + $0x4d0] sm:$0xff]
  %v297 = vld [vmem:[%s2 + $0x4d8] sm:$0xff]
  %v298 = vld [vmem:[%s2 + $0x4e0] sm:$0xff]
  %v299 = vld [vmem:[%s2 + $0x4e8] sm:$0xff]
  %v300 = vld [vmem:[%s2 + $0x4f0] sm:$0xff]
  %v301 = vld [vmem:[%s2 + $0x4f8] sm:$0xff]
  %v302 = vld [vmem:[%s2 + $0x500] sm:$0xff]
  %v303 = vld [vmem:[%s2 + $0x508] sm:$0xff]
  %v304 = vld [vmem:[%s2 + $0x510] sm:$0xff]
  %v305 = vld [vmem:[%s2 + $0x518] sm:$0xff]
  %v306 = vld [vmem:[%s2 + $0x520] sm:$0xff]
  %v307 = vld [vmem:[%s2 + $0x528] sm:$0xff]
  %v308 = vld [vmem:[%s2 + $0x530] sm:$0xff]
  %v309 = vld [vmem:[%s2 + $0x538] sm:$0xff]
  %v310 = vld [vmem:[%s2 + $0x540] sm:$0xff]
  %v311 = vld [vmem:[%s2 + $0x548] sm:$0xff]
  %v312 = vld [vmem:[%s2 + $0x550] sm:$0xff]
  %v313 = vld [vmem:[%s2 + $0x558] sm:$0xff]
  %v314 = vld [vmem:[%s2 + $0x560] sm:$0xff]
  %v315 = vld [vmem:[%s2 + $0x568] sm:$0xff]
  %v316 = vld [vmem:[%s2 + $0x570] sm:$0xff]
  %v317 = vld [vmem:[%s2 + $0x578] sm:$0xff]
  %v318 = vld [vmem:[%s2 + $0x580] sm:$0xff]
  %v319 = vld [vmem:[%s2 + $0x588] sm:$0xff]
  %v320 = vld [vmem:[%s2 + $0x590] sm:$0xff]
  %v321 = vld [vmem:[%s2 + $0x598] sm:$0xff]
  %v322 = vld [vmem:[%s2 + $0x5a0] sm:$0xff]
  %v323 = vld [vmem:[%s2 + $0x5a8] sm:$0xff]
  %v324 = vld [vmem:[%s2 + $0x5b0] sm:$0xff]
  %v325 = vld [vmem:[%s2 + $0x5b8] sm:$0xff]
  %v326 = vld [vmem:[%s2 + $0x5c0] sm:$0xff]
  %v327 = vld [vmem:[%s2 + $0x5c8] sm:$0xff]
  %v328 = vld [vmem:[%s2 + $0x5d0] sm:$0xff]
  %v329 = vld [vmem:[%s2 + $0x5d8] sm:$0xff]
  %v330 = vld [vmem:[%s2 + $0x5e0] sm:$0xff]
  %v331 = vld [vmem:[%s2 + $0x5e8] sm:$0xff]
  %v332 = vld [vmem:[%s2 + $0x5f0] sm:$0xff]
  %v333 = vld [vmem:[%s2 + $0x5f8] sm:$0xff]
  %v334 = vld [vmem:[%s2 + $0x600] sm:$0xff]
  %v335 = vld [vmem:[%s2 + $0x608] sm:$0xff]
  %v336 = vld [vmem:[%s2 + $0x610] sm:$0xff]
  %v337 = vld [vmem:[%s2 + $0x618] sm:$0xff]
  %v338 = vld [vmem:[%s2 + $0x620] sm:$0xff]
  %v339 = vld [vmem:[%s2 + $0x628] sm:$0xff]
  %v340 = vld [vmem:[%s2 + $0x630] sm:$0xff]
  %v341 = vld [vmem:[%s2 + $0x638] sm:$0xff]
  %v342 = vld [vmem:[%s2 + $0x640] sm:$0xff]
  %v343 = vld [vmem:[%s2 + $0x648] sm:$0xff]
  %v344 = vld [vmem:[%s2 + $0x650] sm:$0xff]
  %v345 = vld [vmem:[%s2 + $0x658] sm:$0xff]
  %v346 = vld [vmem:[%s2 + $0x660] sm:$0xff]
  %v347 = vld [vmem:[%s2 + $0x668] sm:$0xff]
  %v348 = vld [vmem:[%s2 + $0x670] sm:$0xff]
  %v349 = vld [vmem:[%s2 + $0x678] sm:$0xff]
  %v350 = vld [vmem:[%s2 + $0x680] sm:$0xff]
  %v351 = vld [vmem:[%s2 + $0x688] sm:$0xff]
  %v352 = vld [vmem:[%s2 + $0x690] sm:$0xff]
  %v353 = vld [vmem:[%s2 + $0x698] sm:$0xff]
  %v354 = vld [vmem:[%s2 + $0x6a0] sm:$0xff]
  %v355 = vld [vmem:[%s2 + $0x6a8] sm:$0xff]
  %v356 = vld [vmem:[%s2 + $0x6b0] sm:$0xff]
  %v357 = vld [vmem:[%s2 + $0x6b8] sm:$0xff]
  %v358 = vld [vmem:[%s2 + $0x6c0] sm:$0xff]
  %v359 = vld [vmem:[%s2 + $0x6c8] sm:$0xff]
  %v360 = vld [vmem:[%s2 + $0x6d0] sm:$0xff]
  %v361 = vld [vmem:[%s2 + $0x6d8] sm:$0xff]
  %v362 = vld [vmem:[%s2 + $0x6e0] sm:$0xff]
  %v363 = vld [vmem:[%s2 + $0x6e8] sm:$0xff]
  %v364 = vld [vmem:[%s2 + $0x6f0] sm:$0xff]
  %v365 = vld [vmem:[%s2 + $0x6f8] sm:$0xff]
  %v366 = vld [vmem:[%s2 + $0x700] sm:$0xff]
  %v367 = vld [vmem:[%s2 + $0x708] sm:$0xff]
  %v368 = vld [vmem:[%s2 + $0x710] sm:$0xff]
  %v369 = vld [vmem:[%s2 + $0x718] sm:$0xff]
  %v370 = vld [vmem:[%s2 + $0x720] sm:$0xff]
  %v371 = vld [vmem:[%s2 + $0x728] sm:$0xff]
  %v372 = vld [vmem:[%s2 + $0x730] sm:$0xff]
  %v373 = vld [vmem:[%s2 + $0x738] sm:$0xff]
  %v374 = vld [vmem:[%s2 + $0x740] sm:$0xff]
  %v375 = vld [vmem:[%s2 + $0x748] sm:$0xff]
  %v376 = vld [vmem:[%s2 + $0x750] sm:$0xff]
  %v377 = vld [vmem:[%s2 + $0x758] sm:$0xff]
  %v378 = vld [vmem:[%s2 + $0x760] sm:$0xff]
  %v379 = vld [vmem:[%s2 + $0x768] sm:$0xff]
  %v380 = vld [vmem:[%s2 + $0x770] sm:$0xff]
  %v381 = vld [vmem:[%s2 + $0x778] sm:$0xff]
  %v382 = vld [vmem:[%s2 + $0x780] sm:$0xff]
  %v383 = vld [vmem:[%s2 + $0x788] sm:$0xff]
  %v384 = vld [vmem:[%s2 + $0x790] sm:$0xff]
  %v385 = vld [vmem:[%s2 + $0x798] sm:$0xff]
  %v386 = vld [vmem:[%s2 + $0x7a0] sm:$0xff]
  %v387 = vld [vmem:[%s2 + $0x7a8] sm:$0xff]
  %v388 = vld [vmem:[%s2 + $0x7b0] sm:$0xff]
  %v389 = vld [vmem:[%s2 + $0x7b8] sm:$0xff]
  %v390 = vld [vmem:[%s2 + $0x7c0] sm:$0xff]
  %v391 = vld [vmem:[%s2 + $0x7c8] sm:$0xff]
  %v392 = vld [vmem:[%s2 + $0x7d0] sm:$0xff]
  %v393 = vld [vmem:[%s2 + $0x7d8] sm:$0xff]
  %v394 = vld [vmem:[%s2 + $0x7e0] sm:$0xff]
  %v395 = vld [vmem:[%s2 + $0x7e8] sm:$0xff]
  %v396 = vld [vmem:[%s2 + $0x7f0] sm:$0xff]
  %v397 = vld [vmem:[%s2 + $0x7f8] sm:$0xff]
  %v398 = vld [vmem:[%s2 + $0x800] sm:$0xff]
  %v399 = vld [vmem:[%s2 + $0x808] sm:$0xff]
  %v400 = vld [vmem:[%s2 + $0x810] sm:$0xff]
  %v401 = vld [vmem:[%s2 + $0x818] sm:$0xff]
  %v402 = vld [vmem:[%s2 + $0x820] sm:$0xff]
  %v403 = vld [vmem:[%s2 + $0x828] sm:$0xff]
  %v404 = vld [vmem:[%s2 + $0x830] sm:$0xff]
  %v405 = vld [vmem:[%s2 + $0x838] sm:$0xff]
  %v406 = vld [vmem:[%s2 + $0x840] sm:$0xff]
  %v407 = vld [vmem:[%s2 + $0x848] sm:$0xff]
  %v408 = vld [vmem:[%s2 + $0x850] sm:$0xff]
  %v409 = vld [vmem:[%s2 + $0x858] sm:$0xff]
  %v410 = vld [vmem:[%s2 + $0x860] sm:$0xff]
  %v411 = vld [vmem:[%s2 + $0x868] sm:$0xff]
  %v412 = vld [vmem:[%s2 + $0x870] sm:$0xff]
  %v413 = vld [vmem:[%s2 + $0x878] sm:$0xff]
  %v414 = vld [vmem:[%s2 + $0x880] sm:$0xff]
  %v415 = vld [vmem:[%s2 + $0x888] sm:$0xff]
  %v416 = vld [vmem:[%s2 + $0x890] sm:$0xff]
  %v417 = vld [vmem:[%s2 + $0x898] sm:$0xff]
  %v418 = vld [vmem:[%s2 + $0x8a0] sm:$0xff]
  %v419 = vld [vmem:[%s2 + $0x8a8] sm:$0xff]
  %v420 = vld [vmem:[%s2 + $0x8b0] sm:$0xff]
  %v421 = vld [vmem:[%s2 + $0x8b8] sm:$0xff]
  %v422 = vld [vmem:[%s2 + $0x8c0] sm:$0xff]
  %v423 = vld [vmem:[%s2 + $0x8c8] sm:$0xff]
  %v424 = vld [vmem:[%s2 + $0x8d0] sm:$0xff]
  %v425 = vld [vmem:[%s2 + $0x8d8] sm:$0xff]
  %v426 = vld [vmem:[%s2 + $0x8e0] sm:$0xff]
  %v427 = vld [vmem:[%s2 + $0x8e8] sm:$0xff]
  %v428 = vld [vmem:[%s2 + $0x8f0] sm:$0xff]
  %v429 = vld [vmem:[%s2 + $0x8f8] sm:$0xff]
  %v430 = vld [vmem:[%s2 + $0x900] sm:$0xff]
  %v431 = vld [vmem:[%s2 + $0x908] sm:$0xff]
  %v432 = vld [vmem:[%s2 + $0x910] sm:$0xff]
  %v433 = vld [vmem:[%s2 + $0x918] sm:$0xff]
  %v434 = vld [vmem:[%s2 + $0x920] sm:$0xff]
  %v435 = vld [vmem:[%s2 + $0x928] sm:$0xff]
  %v436 = vld [vmem:[%s2 + $0x930] sm:$0xff]
  %v437 = vld [vmem:[%s2 + $0x938] sm:$0xff]
  %v438 = vld [vmem:[%s2 + $0x940] sm:$0xff]
  %v439 = vld [vmem:[%s2 + $0x948] sm:$0xff]
  %v440 = vld [vmem:[%s2 + $0x950] sm:$0xff]
  %v441 = vld [vmem:[%s2 + $0x958] sm:$0xff]
  %v442 = vld [vmem:[%s2 + $0x960] sm:$0xff]
  %v443 = vld [vmem:[%s2 + $0x968] sm:$0xff]
  %v444 = vld [vmem:[%s2 + $0x970] sm:$0xff]
  %v445 = vld [vmem:[%s2 + $0x978] sm:$0xff]
  %v446 = vld [vmem:[%s2 + $0x980] sm:$0xff]
  %v447 = vld [vmem:[%s2 + $0x988] sm:$0xff]
  %v448 = vld [vmem:[%s2 + $0x990] sm:$0xff]
  %v449 = vld [vmem:[%s2 + $0x998] sm:$0xff]
  %v450 = vld [vmem:[%s2 + $0x9a0] sm:$0xff]
  %v451 = vld [vmem:[%s2 + $0x9a8] sm:$0xff]
  %v452 = vld [vmem:[%s2 + $0x9b0] sm:$0xff]
  %v453 = vld [vmem:[%s2 + $0x9b8] sm:$0xff]
  %v454 = vld [vmem:[%s2 + $0x9c0] sm:$0xff]
  %v455 = vld [vmem:[%s2 + $0x9c8] sm:$0xff]
  %v456 = vld [vmem:[%s2 + $0x9d0] sm:$0xff]
  %v457 = vld [vmem:[%s2 + $0x9d8] sm:$0xff]
  %v458 = vld [vmem:[%s2 + $0x9e0] sm:$0xff]
  %v459 = vld [vmem:[%s2 + $0x9e8] sm:$0xff]
  %v460 = vld [vmem:[%s2 + $0x9f0] sm:$0xff]
  %v461 = vld [vmem:[%s2 + $0x9f8] sm:$0xff]
  %v462 = vld [vmem:[%s2 + $0xa00] sm:$0xff]
  %v463 = vld [vmem:[%s2 + $0xa08] sm:$0xff]
  %v464 = vld [vmem:[%s2 + $0xa10] sm:$0xff]
  %v465 = vld [vmem:[%s2 + $0xa18] sm:$0xff]
  %v466 = vld [vmem:[%s2 + $0xa20] sm:$0xff]
  %v467 = vld [vmem:[%s2 + $0xa28] sm:$0xff]
  %v468 = vld [vmem:[%s2 + $0xa30] sm:$0xff]
  %v469 = vld [vmem:[%s2 + $0xa38] sm:$0xff]
  %v470 = vld [vmem:[%s2 + $0xa40] sm:$0xff]
  %v471 = vld [vmem:[%s2 + $0xa48] sm:$0xff]
  %v472 = vld [vmem:[%s2 + $0xa50] sm:$0xff]
  %v473 = vld [vmem:[%s2 + $0xa58] sm:$0xff]
  %v474 = vld [vmem:[%s2 + $0xa60] sm:$0xff]
  %v475 = vld [vmem:[%s2 + $0xa68] sm:$0xff]
  %v476 = vld [vmem:[%s2 + $0xa70] sm:$0xff]
  %v477 = vld [vmem:[%s2 + $0xa78] sm:$0xff]
  %v478 = vld [vmem:[%s2 + $0xa80] sm:$0xff]
  %v479 = vld [vmem:[%s2 + $0xa88] sm:$0xff]
  %v480 = vld [vmem:[%s2 + $0xa90] sm:$0xff]
  %v481 = vld [vmem:[%s2 + $0xa98] sm:$0xff]
  %v482 = vld [vmem:[%s2 + $0xaa0] sm:$0xff]
  %v483 = vld [vmem:[%s2 + $0xaa8] sm:$0xff]
  %v484 = vld [vmem:[%s2 + $0xab0] sm:$0xff]
  %v485 = vld [vmem:[%s2 + $0xab8] sm:$0xff]
  %v486 = vld [vmem:[%s2 + $0xac0] sm:$0xff]
  %v487 = vld [vmem:[%s2 + $0xac8] sm:$0xff]
  %v488 = vld [vmem:[%s2 + $0xad0] sm:$0xff]
  %v489 = vld [vmem:[%s2 + $0xad8] sm:$0xff]
  %v490 = vld [vmem:[%s2 + $0xae0] sm:$0xff]
  %v491 = vld [vmem:[%s2 + $0xae8] sm:$0xff]
  %v492 = vld [vmem:[%s2 + $0xaf0] sm:$0xff]
  %v493 = vld [vmem:[%s2 + $0xaf8] sm:$0xff]
  %v494 = vld [vmem:[%s2 + $0xb00] sm:$0xff]
  %v495 = vld [vmem:[%s2 + $0xb08] sm:$0xff]
  %v496 = vld [vmem:[%s2 + $0xb10] sm:$0xff]
  %v497 = vld [vmem:[%s2 + $0xb18] sm:$0xff]
  %v498 = vld [vmem:[%s2 + $0xb20] sm:$0xff]
  %v499 = vld [vmem:[%s2 + $0xb28] sm:$0xff]
  %v500 = vld [vmem:[%s2 + $0xb30] sm:$0xff]
  %v501 = vld [vmem:[%s2 + $0xb38] sm:$0xff]
  %v502 = vld [vmem:[%s2 + $0xb40] sm:$0xff]
  %v503 = vld [vmem:[%s2 + $0xb48] sm:$0xff]
  %v504 = vld [vmem:[%s2 + $0xb50] sm:$0xff]
  %v505 = vld [vmem:[%s2 + $0xb58] sm:$0xff]
  %v506 = vld [vmem:[%s2 + $0xb60] sm:$0xff]
  %v507 = vld [vmem:[%s2 + $0xb68] sm:$0xff]
  %v508 = vld [vmem:[%s2 + $0xb70] sm:$0xff]
  %v509 = vld [vmem:[%s2 + $0xb78] sm:$0xff]
  %v510 = vld [vmem:[%s2 + $0xb80] sm:$0xff]
  %v511 = vld [vmem:[%s2 + $0xb88] sm:$0xff]
  %v512 = vld [vmem:[%s2 + $0xb90] sm:$0xff]
  %v513 = vld [vmem:[%s2 + $0xb98] sm:$0xff]
  %v514 = vld [vmem:[%s2 + $0xba0] sm:$0xff]
  %v515 = vld [vmem:[%s2 + $0xba8] sm:$0xff]
  %v516 = vld [vmem:[%s2 + $0xbb0] sm:$0xff]
  %v517 = vld [vmem:[%s2 + $0xbb8] sm:$0xff]
  %v518 = vld [vmem:[%s2 + $0xbc0] sm:$0xff]
  %v519 = vld [vmem:[%s2 + $0xbc8] sm:$0xff]
  %v520 = vld [vmem:[%s2 + $0xbd0] sm:$0xff]
  %v521 = vld [vmem:[%s2 + $0xbd8] sm:$0xff]
  %v522 = vld [vmem:[%s2 + $0xbe0] sm:$0xff]
  %v523 = vld [vmem:[%s2 + $0xbe8] sm:$0xff]
  %v524 = vld [vmem:[%s2 + $0xbf0] sm:$0xff]
  %v525 = vld [vmem:[%s2 + $0xbf8] sm:$0xff]
  %v526 = vld [vmem:[%s2 + $0xc00] sm:$0xff]
  %v527 = vld [vmem:[%s2 + $0xc08] sm:$0xff]
  %v528 = vld [vmem:[%s2 + $0xc10] sm:$0xff]
  %v529 = vld [vmem:[%s2 + $0xc18] sm:$0xff]
  %v530 = vld [vmem:[%s2 + $0xc20] sm:$0xff]
  %v531 = vld [vmem:[%s2 + $0xc28] sm:$0xff]
  %v532 = vld [vmem:[%s2 + $0xc30] sm:$0xff]
  %v533 = vld [vmem:[%s2 + $0xc38] sm:$0xff]
  %v534 = vld [vmem:[%s2 + $0xc40] sm:$0xff]
  %v535 = vld [vmem:[%s2 + $0xc48] sm:$0xff]
  %v536 = vld [vmem:[%s2 + $0xc50] sm:$0xff]
  %v537 = vld [vmem:[%s2 + $0xc58] sm:$0xff]
  %v538 = vld [vmem:[%s2 + $0xc60] sm:$0xff]
  %v539 = vld [vmem:[%s2 + $0xc68] sm:$0xff]
  %v540 = vld [vmem:[%s2 + $0xc70] sm:$0xff]
  %v541 = vld [vmem:[%s2 + $0xc78] sm:$0xff]
  %v542 = vld [vmem:[%s2 + $0xc80] sm:$0xff]
  %v543 = vld [vmem:[%s2 + $0xc88] sm:$0xff]
  %v544 = vld [vmem:[%s2 + $0xc90] sm:$0xff]
  %v545 = vld [vmem:[%s2 + $0xc98] sm:$0xff]
  %v546 = vld [vmem:[%s2 + $0xca0] sm:$0xff]
  %v547 = vld [vmem:[%s2 + $0xca8] sm:$0xff]
  %v548 = vld [vmem:[%s2 + $0xcb0] sm:$0xff]
  %v549 = vld [vmem:[%s2 + $0xcb8] sm:$0xff]
  %v550 = vld [vmem:[%s2 + $0xcc0] sm:$0xff]
  %v551 = vld [vmem:[%s2 + $0xcc8] sm:$0xff]
  %v552 = vld [vmem:[%s2 + $0xcd0] sm:$0xff]
  %v553 = vld [vmem:[%s2 + $0xcd8] sm:$0xff]
  %v554 = vld [vmem:[%s2 + $0xce0] sm:$0xff]
  %v555 = vld [vmem:[%s2 + $0xce8] sm:$0xff]
  %v556 = vld [vmem:[%s2 + $0xcf0] sm:$0xff]
  %v557 = vld [vmem:[%s2 + $0xcf8] sm:$0xff]
  %v558 = vld [vmem:[%s2 + $0xd00] sm:$0xff]
  %v559 = vld [vmem:[%s2 + $0xd08] sm:$0xff]
  %v560 = vld [vmem:[%s2 + $0xd10] sm:$0xff]
  %v561 = vld [vmem:[%s2 + $0xd18] sm:$0xff]
  %v562 = vld [vmem:[%s2 + $0xd20] sm:$0xff]
  %v563 = vld [vmem:[%s2 + $0xd28] sm:$0xff]
  %v564 = vld [vmem:[%s2 + $0xd30] sm:$0xff]
  %v565 = vld [vmem:[%s2 + $0xd38] sm:$0xff]
  %v566 = vld [vmem:[%s2 + $0xd40] sm:$0xff]
  %v567 = vld [vmem:[%s2 + $0xd48] sm:$0xff]
  %v568 = vld [vmem:[%s2 + $0xd50] sm:$0xff]
  %v569 = vld [vmem:[%s2 + $0xd58] sm:$0xff]
  %v570 = vld [vmem:[%s2 + $0xd60] sm:$0xff]
  %v571 = vld [vmem:[%s2 + $0xd68] sm:$0xff]
  %v572 = vld [vmem:[%s2 + $0xd70] sm:$0xff]
  %v573 = vld [vmem:[%s2 + $0xd78] sm:$0xff]
  %v574 = vld [vmem:[%s2 + $0xd80] sm:$0xff]
  %v575 = vld [vmem:[%s2 + $0xd88] sm:$0xff]
  %v576 = vld [vmem:[%s2 + $0xd90] sm:$0xff]
  %v577 = vld [vmem:[%s2 + $0xd98] sm:$0xff]
  %v578 = vld [vmem:[%s2 + $0xda0] sm:$0xff]
  %v579 = vld [vmem:[%s2 + $0xda8] sm:$0xff]
  %v580 = vld [vmem:[%s2 + $0xdb0] sm:$0xff]
  %v581 = vld [vmem:[%s2 + $0xdb8] sm:$0xff]
  %v582 = vld [vmem:[%s2 + $0xdc0] sm:$0xff]
  %v583 = vld [vmem:[%s2 + $0xdc8] sm:$0xff]
  %v584 = vld [vmem:[%s2 + $0xdd0] sm:$0xff]
  %v585 = vld [vmem:[%s2 + $0xdd8] sm:$0xff]
  %v586 = vld [vmem:[%s2 + $0xde0] sm:$0xff]
  %v587 = vld [vmem:[%s2 + $0xde8] sm:$0xff]
  %v588 = vld [vmem:[%s2 + $0xdf0] sm:$0xff]
  %v589 = vld [vmem:[%s2 + $0xdf8] sm:$0xff]
  %v590 = vld [vmem:[%s2 + $0xe00] sm:$0xff]
  %v591 = vld [vmem:[%s2 + $0xe08] sm:$0xff]
  %v592 = vld [vmem:[%s2 + $0xe10] sm:$0xff]
  %v593 = vld [vmem:[%s2 + $0xe18] sm:$0xff]
  %v594 = vld [vmem:[%s2 + $0xe20] sm:$0xff]
  %v595 = vld [vmem:[%s2 + $0xe28] sm:$0xff]
  %v596 = vld [vmem:[%s2 + $0xe30] sm:$0xff]
  %v597 = vld [vmem:[%s2 + $0xe38] sm:$0xff]
  %v598 = vld [vmem:[%s2 + $0xe40] sm:$0xff]
  %v599 = vld [vmem:[%s2 + $0xe48] sm:$0xff]
  %v600 = vld [vmem:[%s2 + $0xe50] sm:$0xff]
  %v601 = vld [vmem:[%s2 + $0xe58] sm:$0xff]
  %v602 = vld [vmem:[%s2 + $0xe60] sm:$0xff]
  %v603 = vld [vmem:[%s2 + $0xe68] sm:$0xff]
  %v604 = vld [vmem:[%s2 + $0xe70] sm:$0xff]
  %v605 = vld [vmem:[%s2 + $0xe78] sm:$0xff]
  %v606 = vld [vmem:[%s2 + $0xe80] sm:$0xff]
  %v607 = vld [vmem:[%s2 + $0xe88] sm:$0xff]
  %v608 = vld [vmem:[%s2 + $0xe90] sm:$0xff]
  %v609 = vld [vmem:[%s2 + $0xe98] sm:$0xff]
  %v610 = vld [vmem:[%s2 + $0xea0] sm:$0xff]
  %v611 = vld [vmem:[%s2 + $0xea8] sm:$0xff]
  %v612 = vld [vmem:[%s2 + $0xeb0] sm:$0xff]
  %v613 = vld [vmem:[%s2 + $0xeb8] sm:$0xff]
  %v614 = vld [vmem:[%s2 + $0xec0] sm:$0xff]
  %v615 = vld [vmem:[%s2 + $0xec8] sm:$0xff]
  %v616 = vld [vmem:[%s2 + $0xed0] sm:$0xff]
  %v617 = vld [vmem:[%s2 + $0xed8] sm:$0xff]
  %v618 = vld [vmem:[%s2 + $0xee0] sm:$0xff]
  %v619 = vld [vmem:[%s2 + $0xee8] sm:$0xff]
  %v620 = vld [vmem:[%s2 + $0xef0] sm:$0xff]
  %v621 = vld [vmem:[%s2 + $0xef8] sm:$0xff]
  %v622 = vld [vmem:[%s2 + $0xf00] sm:$0xff]
  %v623 = vld [vmem:[%s2 + $0xf08] sm:$0xff]
  %v624 = vld [vmem:[%s2 + $0xf10] sm:$0xff]
  %v625 = vld [vmem:[%s2 + $0xf18] sm:$0xff]
  %v626 = vld [vmem:[%s2 + $0xf20] sm:$0xff]
  %v627 = vld [vmem:[%s2 + $0xf28] sm:$0xff]
  %v628 = vld [vmem:[%s2 + $0xf30] sm:$0xff]
  %v629 = vld [vmem:[%s2 + $0xf38] sm:$0xff]
  %v630 = vld [vmem:[%s2 + $0xf40] sm:$0xff]
  %v631 = vld [vmem:[%s2 + $0xf48] sm:$0xff]
  %v632 = vld [vmem:[%s2 + $0xf50] sm:$0xff]
  %v633 = vld [vmem:[%s2 + $0xf58] sm:$0xff]
  %v634 = vld [vmem:[%s2 + $0xf60] sm:$0xff]
  %v635 = vld [vmem:[%s2 + $0xf68] sm:$0xff]
  %v636 = vld [vmem:[%s2 + $0xf70] sm:$0xff]
  %v637 = vld [vmem:[%s2 + $0xf78] sm:$0xff]
  %v638 = vld [vmem:[%s2 + $0xf80] sm:$0xff]
  %v639 = vld [vmem:[%s2 + $0xf88] sm:$0xff]
  %v640 = vld [vmem:[%s2 + $0xf90] sm:$0xff]
  %v641 = vld [vmem:[%s2 + $0xf98] sm:$0xff]
  %v642 = vld [vmem:[%s2 + $0xfa0] sm:$0xff]
  %v643 = vld [vmem:[%s2 + $0xfa8] sm:$0xff]
  %v644 = vld [vmem:[%s2 + $0xfb0] sm:$0xff]
  %v645 = vld [vmem:[%s2 + $0xfb8] sm:$0xff]
  %v646 = vld [vmem:[%s2 + $0xfc0] sm:$0xff]
  %v647 = vld [vmem:[%s2 + $0xfc8] sm:$0xff]
  %v648 = vld [vmem:[%s2 + $0xfd0] sm:$0xff]
  %v649 = vld [vmem:[%s2 + $0xfd8] sm:$0xff]
  %v650 = vld [vmem:[%s2 + $0xfe0] sm:$0xff]
  %v651 = vld [vmem:[%s2 + $0xfe8] sm:$0xff]
  %v652 = vld [vmem:[%s2 + $0xff0] sm:$0xff]
  %v653 = vld [vmem:[%s2 + $0xff8] sm:$0xff]
  %654 = vmatprep.subr.mxu0 0.0
  %655 = vmatpush1.msra.mxu0 %v142
  %656 = vmatprep.subr.mxu0 0.0
  %657 = vmatpush1.msra.mxu0 %v143
  %658 = vmatprep.subr.mxu0 0.0
  %659 = vmatpush1.msra.mxu0 %v144
  %660 = vmatprep.subr.mxu0 0.0
  %661 = vmatpush1.msra.mxu0 %v145
  %662 = vmatprep.subr.mxu0 0.0
  %663 = vmatpush1.msra.mxu0 %v146
  %664 = vmatprep.subr.mxu0 0.0
  %665 = vmatpush1.msra.mxu0 %v147
  %666 = vmatprep.subr.mxu0 0.0
  %667 = vmatpush1.msra.mxu0 %v148
  %668 = vmatprep.subr.mxu0 0.0
  %669 = vmatpush1.msra.mxu0 %v149
  %670 = vmatprep.subr.mxu0 0.0
  %671 = vmatpush1.msra.mxu0 %v150
  %672 = vmatprep.subr.mxu0 0.0
  %673 = vmatpush1.msra.mxu0 %v151
  %674 = vmatprep.subr.mxu0 0.0
  %675 = vmatpush1.msra.mxu0 %v152
  %676 = vmatprep.subr.mxu0 0.0
  %677 = vmatpush1.msra.mxu0 %v153
  %678 = vmatprep.subr.mxu0 0.0
  %679 = vmatpush1.msra.mxu0 %v154
  %680 = vmatprep.subr.mxu0 0.0
  %681 = vmatpush1.msra.mxu0 %v155
  %682 = vmatprep.subr.mxu0 0.0
  %683 = vmatpush1.msra.mxu0 %v156
  %684 = vmatprep.subr.mxu0 0.0
  %685 = vmatpush1.msra.mxu0 %v157
  %686 = vmatprep.subr.mxu0 0.0
  %687 = vmatpush1.msra.mxu0 %v158
  %688 = vmatprep.subr.mxu0 0.0
  %689 = vmatpush1.msra.mxu0 %v159
  %690 = vmatprep.subr.mxu0 0.0
  %691 = vmatpush1.msra.mxu0 %v160
  %692 = vmatprep.subr.mxu0 0.0
  %693 = vmatpush1.msra.mxu0 %v161
  %694 = vmatprep.subr.mxu0 0.0
  %695 = vmatpush1.msra.mxu0 %v162
  %696 = vmatprep.subr.mxu0 0.0
  %697 = vmatpush1.msra.mxu0 %v163
  %698 = vmatprep.subr.mxu0 0.0
  %699 = vmatpush1.msra.mxu0 %v164
  %700 = vmatprep.subr.mxu0 0.0
  %701 = vmatpush1.msra.mxu0 %v165
  %702 = vmatprep.subr.mxu0 0.0
  %703 = vmatpush1.msra.mxu0 %v166
  %704 = vmatprep.subr.mxu0 0.0
  %705 = vmatpush1.msra.mxu0 %v167
  %706 = vmatprep.subr.mxu0 0.0
  %707 = vmatpush1.msra.mxu0 %v168
  %708 = vmatprep.subr.mxu0 0.0
  %709 = vmatpush1.msra.mxu0 %v169
  %710 = vmatprep.subr.mxu0 0.0
  %711 = vmatpush1.msra.mxu0 %v170
  %712 = vmatprep.subr.mxu0 0.0
  %713 = vmatpush1.msra.mxu0 %v171
  %714 = vmatprep.subr.mxu0 0.0
  %715 = vmatpush1.msra.mxu0 %v172
  %716 = vmatprep.subr.mxu0 0.0
  %717 = vmatpush1.msra.mxu0 %v173
  %718 = vmatprep.mubr.f32.mxu0 %v111
  %719 = vmatmul.mubr.f32.gmra.mrb[0].mxu0 %v110
  %v720 = vpop.f32.mrb[0].mxu0
  %v721 = vadd.f32 0.0, %v720
  %v722 = vpop.f32.mrb[0].mxu0
  %723 = vdwg.mxu0
  %724 = vmatprep.subr.mxu0 0.0
  %725 = vmatpush1.msra.mxu0 %v174
  %726 = vmatprep.subr.mxu0 0.0
  %727 = vmatpush1.msra.mxu0 %v175
  %728 = vmatprep.subr.mxu0 0.0
  %729 = vmatpush1.msra.mxu0 %v176
  %730 = vmatprep.subr.mxu0 0.0
  %731 = vmatpush1.msra.mxu0 %v177
  %732 = vmatprep.subr.mxu0 0.0
  %733 = vmatpush1.msra.mxu0 %v178
  %734 = vmatprep.subr.mxu0 0.0
  %735 = vmatpush1.msra.mxu0 %v179
  %736 = vmatprep.subr.mxu0 0.0
  %737 = vmatpush1.msra.mxu0 %v180
  %738 = vmatprep.subr.mxu0 0.0
  %739 = vmatpush1.msra.mxu0 %v181
  %740 = vmatprep.subr.mxu0 0.0
  %741 = vmatpush1.msra.mxu0 %v182
  %742 = vmatprep.subr.mxu0 0.0
  %743 = vmatpush1.msra.mxu0 %v183
  %744 = vmatprep.subr.mxu0 0.0
  %745 = vmatpush1.msra.mxu0 %v184
  %746 = vmatprep.subr.mxu0 0.0
  %747 = vmatpush1.msra.mxu0 %v185
  %748 = vmatprep.subr.mxu0 0.0
  %749 = vmatpush1.msra.mxu0 %v186
  %750 = vmatprep.subr.mxu0 0.0
  %751 = vmatpush1.msra.mxu0 %v187
  %752 = vmatprep.subr.mxu0 0.0
  %753 = vmatpush1.msra.mxu0 %v188
  %754 = vmatprep.subr.mxu0 0.0
  %755 = vmatpush1.msra.mxu0 %v189
  %756 = vmatprep.subr.mxu0 0.0
  %757 = vmatpush1.msra.mxu0 %v190
  %758 = vmatprep.subr.mxu0 0.0
  %759 = vmatpush1.msra.mxu0 %v191
  %760 = vmatprep.subr.mxu0 0.0
  %761 = vmatpush1.msra.mxu0 %v192
  %762 = vmatprep.subr.mxu0 0.0
  %763 = vmatpush1.msra.mxu0 %v193
  %764 = vmatprep.subr.mxu0 0.0
  %765 = vmatpush1.msra.mxu0 %v194
  %766 = vmatprep.subr.mxu0 0.0
  %767 = vmatpush1.msra.mxu0 %v195
  %768 = vmatprep.subr.mxu0 0.0
  %769 = vmatpush1.msra.mxu0 %v196
  %770 = vmatprep.subr.mxu0 0.0
  %771 = vmatpush1.msra.mxu0 %v197
  %772 = vmatprep.subr.mxu0 0.0
  %773 = vmatpush1.msra.mxu0 %v198
  %774 = vmatprep.subr.mxu0 0.0
  %775 = vmatpush1.msra.mxu0 %v199
  %776 = vmatprep.subr.mxu0 0.0
  %777 = vmatpush1.msra.mxu0 %v200
  %778 = vmatprep.subr.mxu0 0.0
  %779 = vmatpush1.msra.mxu0 %v201
  %780 = vmatprep.subr.mxu0 0.0
  %781 = vmatpush1.msra.mxu0 %v202
  %782 = vmatprep.subr.mxu0 0.0
  %783 = vmatpush1.msra.mxu0 %v203
  %784 = vmatprep.subr.mxu0 0.0
  %785 = vmatpush1.msra.mxu0 %v204
  %786 = vmatprep.subr.mxu0 0.0
  %787 = vmatpush1.msra.mxu0 %v205
  %788 = vmatprep.mubr.f32.mxu0 %v113
  %789 = vmatmul.mubr.f32.gmra.mrb[0].mxu0 %v112
  %v790 = vpop.f32.mrb[0].mxu0
  %v791 = vadd.f32 %v721, %v790
  %v792 = vpop.f32.mrb[0].mxu0
  %793 = vdwg.mxu0
  %794 = vmatprep.subr.mxu0 0.0
  %795 = vmatpush1.msra.mxu0 %v206
  %796 = vmatprep.subr.mxu0 0.0
  %797 = vmatpush1.msra.mxu0 %v207
  %798 = vmatprep.subr.mxu0 0.0
  %799 = vmatpush1.msra.mxu0 %v208
  %800 = vmatprep.subr.mxu0 0.0
  %801 = vmatpush1.msra.mxu0 %v209
  %802 = vmatprep.subr.mxu0 0.0
  %803 = vmatpush1.msra.mxu0 %v210
  %804 = vmatprep.subr.mxu0 0.0
  %805 = vmatpush1.msra.mxu0 %v211
  %806 = vmatprep.subr.mxu0 0.0
  %807 = vmatpush1.msra.mxu0 %v212
  %808 = vmatprep.subr.mxu0 0.0
  %809 = vmatpush1.msra.mxu0 %v213
  %810 = vmatprep.subr.mxu0 0.0
  %811 = vmatpush1.msra.mxu0 %v214
  %812 = vmatprep.subr.mxu0 0.0
  %813 = vmatpush1.msra.mxu0 %v215
  %814 = vmatprep.subr.mxu0 0.0
  %815 = vmatpush1.msra.mxu0 %v216
  %816 = vmatprep.subr.mxu0 0.0
  %817 = vmatpush1.msra.mxu0 %v217
  %818 = vmatprep.subr.mxu0 0.0
  %819 = vmatpush1.msra.mxu0 %v218
  %820 = vmatprep.subr.mxu0 0.0
  %821 = vmatpush1.msra.mxu0 %v219
  %822 = vmatprep.subr.mxu0 0.0
  %823 = vmatpush1.msra.mxu0 %v220
  %824 = vmatprep.subr.mxu0 0.0
  %825 = vmatpush1.msra.mxu0 %v221
  %826 = vmatprep.subr.mxu0 0.0
  %827 = vmatpush1.msra.mxu0 %v222
  %828 = vmatprep.subr.mxu0 0.0
  %829 = vmatpush1.msra.mxu0 %v223
  %830 = vmatprep.subr.mxu0 0.0
  %831 = vmatpush1.msra.mxu0 %v224
  %832 = vmatprep.subr.mxu0 0.0
  %833 = vmatpush1.msra.mxu0 %v225
  %834 = vmatprep.subr.mxu0 0.0
  %835 = vmatpush1.msra.mxu0 %v226
  %836 = vmatprep.subr.mxu0 0.0
  %837 = vmatpush1.msra.mxu0 %v227
  %838 = vmatprep.subr.mxu0 0.0
  %839 = vmatpush1.msra.mxu0 %v228
  %840 = vmatprep.subr.mxu0 0.0
  %841 = vmatpush1.msra.mxu0 %v229
  %842 = vmatprep.subr.mxu0 0.0
  %843 = vmatpush1.msra.mxu0 %v230
  %844 = vmatprep.subr.mxu0 0.0
  %845 = vmatpush1.msra.mxu0 %v231
  %846 = vmatprep.subr.mxu0 0.0
  %847 = vmatpush1.msra.mxu0 %v232
  %848 = vmatprep.subr.mxu0 0.0
  %849 = vmatpush1.msra.mxu0 %v233
  %850 = vmatprep.subr.mxu0 0.0
  %851 = vmatpush1.msra.mxu0 %v234
  %852 = vmatprep.subr.mxu0 0.0
  %853 = vmatpush1.msra.mxu0 %v235
  %854 = vmatprep.subr.mxu0 0.0
  %855 = vmatpush1.msra.mxu0 %v236
  %856 = vmatprep.subr.mxu0 0.0
  %857 = vmatpush1.msra.mxu0 %v237
  %858 = vmatprep.mubr.f32.mxu0 %v115
  %859 = vmatmul.mubr.f32.gmra.mrb[0].mxu0 %v114
  %v860 = vpop.f32.mrb[0].mxu0
  %v861 = vadd.f32 %v791, %v860
  %v862 = vpop.f32.mrb[0].mxu0
  %863 = vdwg.mxu0
  %864 = vmatprep.subr.mxu0 0.0
  %865 = vmatpush1.msra.mxu0 %v238
  %866 = vmatprep.subr.mxu0 0.0
  %867 = vmatpush1.msra.mxu0 %v239
  %868 = vmatprep.subr.mxu0 0.0
  %869 = vmatpush1.msra.mxu0 %v240
  %870 = vmatprep.subr.mxu0 0.0
  %871 = vmatpush1.msra.mxu0 %v241
  %872 = vmatprep.subr.mxu0 0.0
  %873 = vmatpush1.msra.mxu0 %v242
  %874 = vmatprep.subr.mxu0 0.0
  %875 = vmatpush1.msra.mxu0 %v243
  %876 = vmatprep.subr.mxu0 0.0
  %877 = vmatpush1.msra.mxu0 %v244
  %878 = vmatprep.subr.mxu0 0.0
  %879 = vmatpush1.msra.mxu0 %v245
  %880 = vmatprep.subr.mxu0 0.0
  %881 = vmatpush1.msra.mxu0 %v246
  %882 = vmatprep.subr.mxu0 0.0
  %883 = vmatpush1.msra.mxu0 %v247
  %884 = vmatprep.subr.mxu0 0.0
  %885 = vmatpush1.msra.mxu0 %v248
  %886 = vmatprep.subr.mxu0 0.0
  %887 = vmatpush1.msra.mxu0 %v249
  %888 = vmatprep.subr.mxu0 0.0
  %889 = vmatpush1.msra.mxu0 %v250
  %890 = vmatprep.subr.mxu0 0.0
  %891 = vmatpush1.msra.mxu0 %v251
  %892 = vmatprep.subr.mxu0 0.0
  %893 = vmatpush1.msra.mxu0 %v252
  %894 = vmatprep.subr.mxu0 0.0
  %895 = vmatpush1.msra.mxu0 %v253
  %896 = vmatprep.subr.mxu0 0.0
  %897 = vmatpush1.msra.mxu0 %v254
  %898 = vmatprep.subr.mxu0 0.0
  %899 = vmatpush1.msra.mxu0 %v255
  %900 = vmatprep.subr.mxu0 0.0
  %901 = vmatpush1.msra.mxu0 %v256
  %902 = vmatprep.subr.mxu0 0.0
  %903 = vmatpush1.msra.mxu0 %v257
  %904 = vmatprep.subr.mxu0 0.0
  %905 = vmatpush1.msra.mxu0 %v258
  %906 = vmatprep.subr.mxu0 0.0
  %907 = vmatpush1.msra.mxu0 %v259
  %908 = vmatprep.subr.mxu0 0.0
  %909 = vmatpush1.msra.mxu0 %v260
  %910 = vmatprep.subr.mxu0 0.0
  %911 = vmatpush1.msra.mxu0 %v261
  %912 = vmatprep.subr.mxu0 0.0
  %913 = vmatpush1.msra.mxu0 %v262
  %914 = vmatprep.subr.mxu0 0.0
  %915 = vmatpush1.msra.mxu0 %v263
  %916 = vmatprep.subr.mxu0 0.0
  %917 = vmatpush1.msra.mxu0 %v264
  %918 = vmatprep.subr.mxu0 0.0
  %919 = vmatpush1.msra.mxu0 %v265
  %920 = vmatprep.subr.mxu0 0.0
  %921 = vmatpush1.msra.mxu0 %v266
  %922 = vmatprep.subr.mxu0 0.0
  %923 = vmatpush1.msra.mxu0 %v267
  %924 = vmatprep.subr.mxu0 0.0
  %925 = vmatpush1.msra.mxu0 %v268
  %926 = vmatprep.subr.mxu0 0.0
  %927 = vmatpush1.msra.mxu0 %v269
  %928 = vmatprep.mubr.f32.mxu0 %v117
  %929 = vmatmul.mubr.f32.gmra.mrb[0].mxu0 %v116
  %v930 = vpop.f32.mrb[0].mxu0
  %v931 = vadd.f32 %v861, %v930
  %v932 = vpop.f32.mrb[0].mxu0
  %933 = vdwg.mxu0
  %934 = vmatprep.subr.mxu0 0.0
  %935 = vmatpush1.msra.mxu0 %v270
  %936 = vmatprep.subr.mxu0 0.0
  %937 = vmatpush1.msra.mxu0 %v271
  %938 = vmatprep.subr.mxu0 0.0
  %939 = vmatpush1.msra.mxu0 %v272
  %940 = vmatprep.subr.mxu0 0.0
  %941 = vmatpush1.msra.mxu0 %v273
  %942 = vmatprep.subr.mxu0 0.0
  %943 = vmatpush1.msra.mxu0 %v274
  %944 = vmatprep.subr.mxu0 0.0
  %945 = vmatpush1.msra.mxu0 %v275
  %946 = vmatprep.subr.mxu0 0.0
  %947 = vmatpush1.msra.mxu0 %v276
  %948 = vmatprep.subr.mxu0 0.0
  %949 = vmatpush1.msra.mxu0 %v277
  %950 = vmatprep.subr.mxu0 0.0
  %951 = vmatpush1.msra.mxu0 %v278
  %952 = vmatprep.subr.mxu0 0.0
  %953 = vmatpush1.msra.mxu0 %v279
  %954 = vmatprep.subr.mxu0 0.0
  %955 = vmatpush1.msra.mxu0 %v280
  %956 = vmatprep.subr.mxu0 0.0
  %957 = vmatpush1.msra.mxu0 %v281
  %958 = vmatprep.subr.mxu0 0.0
  %959 = vmatpush1.msra.mxu0 %v282
  %960 = vmatprep.subr.mxu0 0.0
  %961 = vmatpush1.msra.mxu0 %v283
  %962 = vmatprep.subr.mxu0 0.0
  %963 = vmatpush1.msra.mxu0 %v284
  %964 = vmatprep.subr.mxu0 0.0
  %965 = vmatpush1.msra.mxu0 %v285
  %966 = vmatprep.subr.mxu0 0.0
  %967 = vmatpush1.msra.mxu0 %v286
  %968 = vmatprep.subr.mxu0 0.0
  %969 = vmatpush1.msra.mxu0 %v287
  %970 = vmatprep.subr.mxu0 0.0
  %971 = vmatpush1.msra.mxu0 %v288
  %972 = vmatprep.subr.mxu0 0.0
  %973 = vmatpush1.msra.mxu0 %v289
  %974 = vmatprep.subr.mxu0 0.0
  %975 = vmatpush1.msra.mxu0 %v290
  %976 = vmatprep.subr.mxu0 0.0
  %977 = vmatpush1.msra.mxu0 %v291
  %978 = vmatprep.subr.mxu0 0.0
  %979 = vmatpush1.msra.mxu0 %v292
  %980 = vmatprep.subr.mxu0 0.0
  %981 = vmatpush1.msra.mxu0 %v293
  %982 = vmatprep.subr.mxu0 0.0
  %983 = vmatpush1.msra.mxu0 %v294
  %984 = vmatprep.subr.mxu0 0.0
  %985 = vmatpush1.msra.mxu0 %v295
  %986 = vmatprep.subr.mxu0 0.0
  %987 = vmatpush1.msra.mxu0 %v296
  %988 = vmatprep.subr.mxu0 0.0
  %989 = vmatpush1.msra.mxu0 %v297
  %990 = vmatprep.subr.mxu0 0.0
  %991 = vmatpush1.msra.mxu0 %v298
  %992 = vmatprep.subr.mxu0 0.0
  %993 = vmatpush1.msra.mxu0 %v299
  %994 = vmatprep.subr.mxu0 0.0
  %995 = vmatpush1.msra.mxu0 %v300
  %996 = vmatprep.subr.mxu0 0.0
  %997 = vmatpush1.msra.mxu0 %v301
  %998 = vmatprep.mubr.f32.mxu0 %v119
  %999 = vmatmul.mubr.f32.gmra.mrb[0].mxu0 %v118
  %v1000 = vpop.f32.mrb[0].mxu0
  %v1001 = vadd.f32 %v931, %v1000
  %v1002 = vpop.f32.mrb[0].mxu0
  %1003 = vdwg.mxu0
  %1004 = vmatprep.subr.mxu0 0.0
  %1005 = vmatpush1.msra.mxu0 %v302
  %1006 = vmatprep.subr.mxu0 0.0
  %1007 = vmatpush1.msra.mxu0 %v303
  %1008 = vmatprep.subr.mxu0 0.0
  %1009 = vmatpush1.msra.mxu0 %v304
  %1010 = vmatprep.subr.mxu0 0.0
  %1011 = vmatpush1.msra.mxu0 %v305
  %1012 = vmatprep.subr.mxu0 0.0
  %1013 = vmatpush1.msra.mxu0 %v306
  %1014 = vmatprep.subr.mxu0 0.0
  %1015 = vmatpush1.msra.mxu0 %v307
  %1016 = vmatprep.subr.mxu0 0.0
  %1017 = vmatpush1.msra.mxu0 %v308
  %1018 = vmatprep.subr.mxu0 0.0
  %1019 = vmatpush1.msra.mxu0 %v309
  %1020 = vmatprep.subr.mxu0 0.0
  %1021 = vmatpush1.msra.mxu0 %v310
  %1022 = vmatprep.subr.mxu0 0.0
  %1023 = vmatpush1.msra.mxu0 %v311
  %1024 = vmatprep.subr.mxu0 0.0
  %1025 = vmatpush1.msra.mxu0 %v312
  %1026 = vmatprep.subr.mxu0 0.0
  %1027 = vmatpush1.msra.mxu0 %v313
  %1028 = vmatprep.subr.mxu0 0.0
  %1029 = vmatpush1.msra.mxu0 %v314
  %1030 = vmatprep.subr.mxu0 0.0
  %1031 = vmatpush1.msra.mxu0 %v315
  %1032 = vmatprep.subr.mxu0 0.0
  %1033 = vmatpush1.msra.mxu0 %v316
  %1034 = vmatprep.subr.mxu0 0.0
  %1035 = vmatpush1.msra.mxu0 %v317
  %1036 = vmatprep.subr.mxu0 0.0
  %1037 = vmatpush1.msra.mxu0 %v318
  %1038 = vmatprep.subr.mxu0 0.0
  %1039 = vmatpush1.msra.mxu0 %v319
  %1040 = vmatprep.subr.mxu0 0.0
  %1041 = vmatpush1.msra.mxu0 %v320
  %1042 = vmatprep.subr.mxu0 0.0
  %1043 = vmatpush1.msra.mxu0 %v321
  %1044 = vmatprep.subr.mxu0 0.0
  %1045 = vmatpush1.msra.mxu0 %v322
  %1046 = vmatprep.subr.mxu0 0.0
  %1047 = vmatpush1.msra.mxu0 %v323
  %1048 = vmatprep.subr.mxu0 0.0
  %1049 = vmatpush1.msra.mxu0 %v324
  %1050 = vmatprep.subr.mxu0 0.0
  %1051 = vmatpush1.msra.mxu0 %v325
  %1052 = vmatprep.subr.mxu0 0.0
  %1053 = vmatpush1.msra.mxu0 %v326
  %1054 = vmatprep.subr.mxu0 0.0
  %1055 = vmatpush1.msra.mxu0 %v327
  %1056 = vmatprep.subr.mxu0 0.0
  %1057 = vmatpush1.msra.mxu0 %v328
  %1058 = vmatprep.subr.mxu0 0.0
  %1059 = vmatpush1.msra.mxu0 %v329
  %1060 = vmatprep.subr.mxu0 0.0
  %1061 = vmatpush1.msra.mxu0 %v330
  %1062 = vmatprep.subr.mxu0 0.0
  %1063 = vmatpush1.msra.mxu0 %v331
  %1064 = vmatprep.subr.mxu0 0.0
  %1065 = vmatpush1.msra.mxu0 %v332
  %1066 = vmatprep.subr.mxu0 0.0
  %1067 = vmatpush1.msra.mxu0 %v333
  %1068 = vmatprep.mubr.f32.mxu0 %v121
  %1069 = vmatmul.mubr.f32.gmra.mrb[0].mxu0 %v120
  %v1070 = vpop.f32.mrb[0].mxu0
  %v1071 = vadd.f32 %v1001, %v1070
  %v1072 = vpop.f32.mrb[0].mxu0
  %1073 = vdwg.mxu0
  %1074 = vmatprep.subr.mxu0 0.0
  %1075 = vmatpush1.msra.mxu0 %v334
  %1076 = vmatprep.subr.mxu0 0.0
  %1077 = vmatpush1.msra.mxu0 %v335
  %1078 = vmatprep.subr.mxu0 0.0
  %1079 = vmatpush1.msra.mxu0 %v336
  %1080 = vmatprep.subr.mxu0 0.0
  %1081 = vmatpush1.msra.mxu0 %v337
  %1082 = vmatprep.subr.mxu0 0.0
  %1083 = vmatpush1.msra.mxu0 %v338
  %1084 = vmatprep.subr.mxu0 0.0
  %1085 = vmatpush1.msra.mxu0 %v339
  %1086 = vmatprep.subr.mxu0 0.0
  %1087 = vmatpush1.msra.mxu0 %v340
  %1088 = vmatprep.subr.mxu0 0.0
  %1089 = vmatpush1.msra.mxu0 %v341
  %1090 = vmatprep.subr.mxu0 0.0
  %1091 = vmatpush1.msra.mxu0 %v342
  %1092 = vmatprep.subr.mxu0 0.0
  %1093 = vmatpush1.msra.mxu0 %v343
  %1094 = vmatprep.subr.mxu0 0.0
  %1095 = vmatpush1.msra.mxu0 %v344
  %1096 = vmatprep.subr.mxu0 0.0
  %1097 = vmatpush1.msra.mxu0 %v345
  %1098 = vmatprep.subr.mxu0 0.0
  %1099 = vmatpush1.msra.mxu0 %v346
  %1100 = vmatprep.subr.mxu0 0.0
  %1101 = vmatpush1.msra.mxu0 %v347
  %1102 = vmatprep.subr.mxu0 0.0
  %1103 = vmatpush1.msra.mxu0 %v348
  %1104 = vmatprep.subr.mxu0 0.0
  %1105 = vmatpush1.msra.mxu0 %v349
  %1106 = vmatprep.subr.mxu0 0.0
  %1107 = vmatpush1.msra.mxu0 %v350
  %1108 = vmatprep.subr.mxu0 0.0
  %1109 = vmatpush1.msra.mxu0 %v351
  %1110 = vmatprep.subr.mxu0 0.0
  %1111 = vmatpush1.msra.mxu0 %v352
  %1112 = vmatprep.subr.mxu0 0.0
  %1113 = vmatpush1.msra.mxu0 %v353
  %1114 = vmatprep.subr.mxu0 0.0
  %1115 = vmatpush1.msra.mxu0 %v354
  %1116 = vmatprep.subr.mxu0 0.0
  %1117 = vmatpush1.msra.mxu0 %v355
  %1118 = vmatprep.subr.mxu0 0.0
  %1119 = vmatpush1.msra.mxu0 %v356
  %1120 = vmatprep.subr.mxu0 0.0
  %1121 = vmatpush1.msra.mxu0 %v357
  %1122 = vmatprep.subr.mxu0 0.0
  %1123 = vmatpush1.msra.mxu0 %v358
  %1124 = vmatprep.subr.mxu0 0.0
  %1125 = vmatpush1.msra.mxu0 %v359
  %1126 = vmatprep.subr.mxu0 0.0
  %1127 = vmatpush1.msra.mxu0 %v360
  %1128 = vmatprep.subr.mxu0 0.0
  %1129 = vmatpush1.msra.mxu0 %v361
  %1130 = vmatprep.subr.mxu0 0.0
  %1131 = vmatpush1.msra.mxu0 %v362
  %1132 = vmatprep.subr.mxu0 0.0
  %1133 = vmatpush1.msra.mxu0 %v363
  %1134 = vmatprep.subr.mxu0 0.0
  %1135 = vmatpush1.msra.mxu0 %v364
  %1136 = vmatprep.subr.mxu0 0.0
  %1137 = vmatpush1.msra.mxu0 %v365
  %1138 = vmatprep.mubr.f32.mxu0 %v123
  %1139 = vmatmul.mubr.f32.gmra.mrb[0].mxu0 %v122
  %v1140 = vpop.f32.mrb[0].mxu0
  %v1141 = vadd.f32 %v1071, %v1140
  %v1142 = vpop.f32.mrb[0].mxu0
  %1143 = vdwg.mxu0
  %1144 = vmatprep.subr.mxu0 0.0
  %1145 = vmatpush1.msra.mxu0 %v366
  %1146 = vmatprep.subr.mxu0 0.0
  %1147 = vmatpush1.msra.mxu0 %v367
  %1148 = vmatprep.subr.mxu0 0.0
  %1149 = vmatpush1.msra.mxu0 %v368
  %1150 = vmatprep.subr.mxu0 0.0
  %1151 = vmatpush1.msra.mxu0 %v369
  %1152 = vmatprep.subr.mxu0 0.0
  %1153 = vmatpush1.msra.mxu0 %v370
  %1154 = vmatprep.subr.mxu0 0.0
  %1155 = vmatpush1.msra.mxu0 %v371
  %1156 = vmatprep.subr.mxu0 0.0
  %1157 = vmatpush1.msra.mxu0 %v372
  %1158 = vmatprep.subr.mxu0 0.0
  %1159 = vmatpush1.msra.mxu0 %v373
  %1160 = vmatprep.subr.mxu0 0.0
  %1161 = vmatpush1.msra.mxu0 %v374
  %1162 = vmatprep.subr.mxu0 0.0
  %1163 = vmatpush1.msra.mxu0 %v375
  %1164 = vmatprep.subr.mxu0 0.0
  %1165 = vmatpush1.msra.mxu0 %v376
  %1166 = vmatprep.subr.mxu0 0.0
  %1167 = vmatpush1.msra.mxu0 %v377
  %1168 = vmatprep.subr.mxu0 0.0
  %1169 = vmatpush1.msra.mxu0 %v378
  %1170 = vmatprep.subr.mxu0 0.0
  %1171 = vmatpush1.msra.mxu0 %v379
  %1172 = vmatprep.subr.mxu0 0.0
  %1173 = vmatpush1.msra.mxu0 %v380
  %1174 = vmatprep.subr.mxu0 0.0
  %1175 = vmatpush1.msra.mxu0 %v381
  %1176 = vmatprep.subr.mxu0 0.0
  %1177 = vmatpush1.msra.mxu0 %v382
  %1178 = vmatprep.subr.mxu0 0.0
  %1179 = vmatpush1.msra.mxu0 %v383
  %1180 = vmatprep.subr.mxu0 0.0
  %1181 = vmatpush1.msra.mxu0 %v384
  %1182 = vmatprep.subr.mxu0 0.0
  %1183 = vmatpush1.msra.mxu0 %v385
  %1184 = vmatprep.subr.mxu0 0.0
  %1185 = vmatpush1.msra.mxu0 %v386
  %1186 = vmatprep.subr.mxu0 0.0
  %1187 = vmatpush1.msra.mxu0 %v387
  %1188 = vmatprep.subr.mxu0 0.0
  %1189 = vmatpush1.msra.mxu0 %v388
  %1190 = vmatprep.subr.mxu0 0.0
  %1191 = vmatpush1.msra.mxu0 %v389
  %1192 = vmatprep.subr.mxu0 0.0
  %1193 = vmatpush1.msra.mxu0 %v390
  %1194 = vmatprep.subr.mxu0 0.0
  %1195 = vmatpush1.msra.mxu0 %v391
  %1196 = vmatprep.subr.mxu0 0.0
  %1197 = vmatpush1.msra.mxu0 %v392
  %1198 = vmatprep.subr.mxu0 0.0
  %1199 = vmatpush1.msra.mxu0 %v393
  %1200 = vmatprep.subr.mxu0 0.0
  %1201 = vmatpush1.msra.mxu0 %v394
  %1202 = vmatprep.subr.mxu0 0.0
  %1203 = vmatpush1.msra.mxu0 %v395
  %1204 = vmatprep.subr.mxu0 0.0
  %1205 = vmatpush1.msra.mxu0 %v396
  %1206 = vmatprep.subr.mxu0 0.0
  %1207 = vmatpush1.msra.mxu0 %v397
  %1208 = vmatprep.mubr.f32.mxu0 %v125
  %1209 = vmatmul.mubr.f32.gmra.mrb[0].mxu0 %v124
  %v1210 = vpop.f32.mrb[0].mxu0
  %v1211 = vadd.f32 %v1141, %v1210
  %v1212 = vpop.f32.mrb[0].mxu0
  %1213 = vdwg.mxu0
  %1214 = vmatprep.subr.mxu0 0.0
  %1215 = vmatpush1.msra.mxu0 %v398
  %1216 = vmatprep.subr.mxu0 0.0
  %1217 = vmatpush1.msra.mxu0 %v399
  %1218 = vmatprep.subr.mxu0 0.0
  %1219 = vmatpush1.msra.mxu0 %v400
  %1220 = vmatprep.subr.mxu0 0.0
  %1221 = vmatpush1.msra.mxu0 %v401
  %1222 = vmatprep.subr.mxu0 0.0
  %1223 = vmatpush1.msra.mxu0 %v402
  %1224 = vmatprep.subr.mxu0 0.0
  %1225 = vmatpush1.msra.mxu0 %v403
  %1226 = vmatprep.subr.mxu0 0.0
  %1227 = vmatpush1.msra.mxu0 %v404
  %1228 = vmatprep.subr.mxu0 0.0
  %1229 = vmatpush1.msra.mxu0 %v405
  %1230 = vmatprep.subr.mxu0 0.0
  %1231 = vmatpush1.msra.mxu0 %v406
  %1232 = vmatprep.subr.mxu0 0.0
  %1233 = vmatpush1.msra.mxu0 %v407
  %1234 = vmatprep.subr.mxu0 0.0
  %1235 = vmatpush1.msra.mxu0 %v408
  %1236 = vmatprep.subr.mxu0 0.0
  %1237 = vmatpush1.msra.mxu0 %v409
  %1238 = vmatprep.subr.mxu0 0.0
  %1239 = vmatpush1.msra.mxu0 %v410
  %1240 = vmatprep.subr.mxu0 0.0
  %1241 = vmatpush1.msra.mxu0 %v411
  %1242 = vmatprep.subr.mxu0 0.0
  %1243 = vmatpush1.msra.mxu0 %v412
  %1244 = vmatprep.subr.mxu0 0.0
  %1245 = vmatpush1.msra.mxu0 %v413
  %1246 = vmatprep.subr.mxu0 0.0
  %1247 = vmatpush1.msra.mxu0 %v414
  %1248 = vmatprep.subr.mxu0 0.0
  %1249 = vmatpush1.msra.mxu0 %v415
  %1250 = vmatprep.subr.mxu0 0.0
  %1251 = vmatpush1.msra.mxu0 %v416
  %1252 = vmatprep.subr.mxu0 0.0
  %1253 = vmatpush1.msra.mxu0 %v417
  %1254 = vmatprep.subr.mxu0 0.0
  %1255 = vmatpush1.msra.mxu0 %v418
  %1256 = vmatprep.subr.mxu0 0.0
  %1257 = vmatpush1.msra.mxu0 %v419
  %1258 = vmatprep.subr.mxu0 0.0
  %1259 = vmatpush1.msra.mxu0 %v420
  %1260 = vmatprep.subr.mxu0 0.0
  %1261 = vmatpush1.msra.mxu0 %v421
  %1262 = vmatprep.subr.mxu0 0.0
  %1263 = vmatpush1.msra.mxu0 %v422
  %1264 = vmatprep.subr.mxu0 0.0
  %1265 = vmatpush1.msra.mxu0 %v423
  %1266 = vmatprep.subr.mxu0 0.0
  %1267 = vmatpush1.msra.mxu0 %v424
  %1268 = vmatprep.subr.mxu0 0.0
  %1269 = vmatpush1.msra.mxu0 %v425
  %1270 = vmatprep.subr.mxu0 0.0
  %1271 = vmatpush1.msra.mxu0 %v426
  %1272 = vmatprep.subr.mxu0 0.0
  %1273 = vmatpush1.msra.mxu0 %v427
  %1274 = vmatprep.subr.mxu0 0.0
  %1275 = vmatpush1.msra.mxu0 %v428
  %1276 = vmatprep.subr.mxu0 0.0
  %1277 = vmatpush1.msra.mxu0 %v429
  %1278 = vmatprep.mubr.f32.mxu0 %v127
  %1279 = vmatmul.mubr.f32.gmra.mrb[0].mxu0 %v126
  %v1280 = vpop.f32.mrb[0].mxu0
  %v1281 = vadd.f32 %v1211, %v1280
  %v1282 = vpop.f32.mrb[0].mxu0
  %1283 = vdwg.mxu0
  %1284 = vmatprep.subr.mxu0 0.0
  %1285 = vmatpush1.msra.mxu0 %v430
  %1286 = vmatprep.subr.mxu0 0.0
  %1287 = vmatpush1.msra.mxu0 %v431
  %1288 = vmatprep.subr.mxu0 0.0
  %1289 = vmatpush1.msra.mxu0 %v432
  %1290 = vmatprep.subr.mxu0 0.0
  %1291 = vmatpush1.msra.mxu0 %v433
  %1292 = vmatprep.subr.mxu0 0.0
  %1293 = vmatpush1.msra.mxu0 %v434
  %1294 = vmatprep.subr.mxu0 0.0
  %1295 = vmatpush1.msra.mxu0 %v435
  %1296 = vmatprep.subr.mxu0 0.0
  %1297 = vmatpush1.msra.mxu0 %v436
  %1298 = vmatprep.subr.mxu0 0.0
  %1299 = vmatpush1.msra.mxu0 %v437
  %1300 = vmatprep.subr.mxu0 0.0
  %1301 = vmatpush1.msra.mxu0 %v438
  %1302 = vmatprep.subr.mxu0 0.0
  %1303 = vmatpush1.msra.mxu0 %v439
  %1304 = vmatprep.subr.mxu0 0.0
  %1305 = vmatpush1.msra.mxu0 %v440
  %1306 = vmatprep.subr.mxu0 0.0
  %1307 = vmatpush1.msra.mxu0 %v441
  %1308 = vmatprep.subr.mxu0 0.0
  %1309 = vmatpush1.msra.mxu0 %v442
  %1310 = vmatprep.subr.mxu0 0.0
  %1311 = vmatpush1.msra.mxu0 %v443
  %1312 = vmatprep.subr.mxu0 0.0
  %1313 = vmatpush1.msra.mxu0 %v444
  %1314 = vmatprep.subr.mxu0 0.0
  %1315 = vmatpush1.msra.mxu0 %v445
  %1316 = vmatprep.subr.mxu0 0.0
  %1317 = vmatpush1.msra.mxu0 %v446
  %1318 = vmatprep.subr.mxu0 0.0
  %1319 = vmatpush1.msra.mxu0 %v447
  %1320 = vmatprep.subr.mxu0 0.0
  %1321 = vmatpush1.msra.mxu0 %v448
  %1322 = vmatprep.subr.mxu0 0.0
  %1323 = vmatpush1.msra.mxu0 %v449
  %1324 = vmatprep.subr.mxu0 0.0
  %1325 = vmatpush1.msra.mxu0 %v450
  %1326 = vmatprep.subr.mxu0 0.0
  %1327 = vmatpush1.msra.mxu0 %v451
  %1328 = vmatprep.subr.mxu0 0.0
  %1329 = vmatpush1.msra.mxu0 %v452
  %1330 = vmatprep.subr.mxu0 0.0
  %1331 = vmatpush1.msra.mxu0 %v453
  %1332 = vmatprep.subr.mxu0 0.0
  %1333 = vmatpush1.msra.mxu0 %v454
  %1334 = vmatprep.subr.mxu0 0.0
  %1335 = vmatpush1.msra.mxu0 %v455
  %1336 = vmatprep.subr.mxu0 0.0
  %1337 = vmatpush1.msra.mxu0 %v456
  %1338 = vmatprep.subr.mxu0 0.0
  %1339 = vmatpush1.msra.mxu0 %v457
  %1340 = vmatprep.subr.mxu0 0.0
  %1341 = vmatpush1.msra.mxu0 %v458
  %1342 = vmatprep.subr.mxu0 0.0
  %1343 = vmatpush1.msra.mxu0 %v459
  %1344 = vmatprep.subr.mxu0 0.0
  %1345 = vmatpush1.msra.mxu0 %v460
  %1346 = vmatprep.subr.mxu0 0.0
  %1347 = vmatpush1.msra.mxu0 %v461
  %1348 = vmatprep.mubr.f32.mxu0 %v129
  %1349 = vmatmul.mubr.f32.gmra.mrb[0].mxu0 %v128
  %v1350 = vpop.f32.mrb[0].mxu0
  %v1351 = vadd.f32 %v1281, %v1350
  %v1352 = vpop.f32.mrb[0].mxu0
  %1353 = vdwg.mxu0
  %1354 = vmatprep.subr.mxu0 0.0
  %1355 = vmatpush1.msra.mxu0 %v462
  %1356 = vmatprep.subr.mxu0 0.0
  %1357 = vmatpush1.msra.mxu0 %v463
  %1358 = vmatprep.subr.mxu0 0.0
  %1359 = vmatpush1.msra.mxu0 %v464
  %1360 = vmatprep.subr.mxu0 0.0
  %1361 = vmatpush1.msra.mxu0 %v465
  %1362 = vmatprep.subr.mxu0 0.0
  %1363 = vmatpush1.msra.mxu0 %v466
  %1364 = vmatprep.subr.mxu0 0.0
  %1365 = vmatpush1.msra.mxu0 %v467
  %1366 = vmatprep.subr.mxu0 0.0
  %1367 = vmatpush1.msra.mxu0 %v468
  %1368 = vmatprep.subr.mxu0 0.0
  %1369 = vmatpush1.msra.mxu0 %v469
  %1370 = vmatprep.subr.mxu0 0.0
  %1371 = vmatpush1.msra.mxu0 %v470
  %1372 = vmatprep.subr.mxu0 0.0
  %1373 = vmatpush1.msra.mxu0 %v471
  %1374 = vmatprep.subr.mxu0 0.0
  %1375 = vmatpush1.msra.mxu0 %v472
  %1376 = vmatprep.subr.mxu0 0.0
  %1377 = vmatpush1.msra.mxu0 %v473
  %1378 = vmatprep.subr.mxu0 0.0
  %1379 = vmatpush1.msra.mxu0 %v474
  %1380 = vmatprep.subr.mxu0 0.0
  %1381 = vmatpush1.msra.mxu0 %v475
  %1382 = vmatprep.subr.mxu0 0.0
  %1383 = vmatpush1.msra.mxu0 %v476
  %1384 = vmatprep.subr.mxu0 0.0
  %1385 = vmatpush1.msra.mxu0 %v477
  %1386 = vmatprep.subr.mxu0 0.0
  %1387 = vmatpush1.msra.mxu0 %v478
  %1388 = vmatprep.subr.mxu0 0.0
  %1389 = vmatpush1.msra.mxu0 %v479
  %1390 = vmatprep.subr.mxu0 0.0
  %1391 = vmatpush1.msra.mxu0 %v480
  %1392 = vmatprep.subr.mxu0 0.0
  %1393 = vmatpush1.msra.mxu0 %v481
  %1394 = vmatprep.subr.mxu0 0.0
  %1395 = vmatpush1.msra.mxu0 %v482
  %1396 = vmatprep.subr.mxu0 0.0
  %1397 = vmatpush1.msra.mxu0 %v483
  %1398 = vmatprep.subr.mxu0 0.0
  %1399 = vmatpush1.msra.mxu0 %v484
  %1400 = vmatprep.subr.mxu0 0.0
  %1401 = vmatpush1.msra.mxu0 %v485
  %1402 = vmatprep.subr.mxu0 0.0
  %1403 = vmatpush1.msra.mxu0 %v486
  %1404 = vmatprep.subr.mxu0 0.0
  %1405 = vmatpush1.msra.mxu0 %v487
  %1406 = vmatprep.subr.mxu0 0.0
  %1407 = vmatpush1.msra.mxu0 %v488
  %1408 = vmatprep.subr.mxu0 0.0
  %1409 = vmatpush1.msra.mxu0 %v489
  %1410 = vmatprep.subr.mxu0 0.0
  %1411 = vmatpush1.msra.mxu0 %v490
  %1412 = vmatprep.subr.mxu0 0.0
  %1413 = vmatpush1.msra.mxu0 %v491
  %1414 = vmatprep.subr.mxu0 0.0
  %1415 = vmatpush1.msra.mxu0 %v492
  %1416 = vmatprep.subr.mxu0 0.0
  %1417 = vmatpush1.msra.mxu0 %v493
  %1418 = vmatprep.mubr.f32.mxu0 %v131
  %1419 = vmatmul.mubr.f32.gmra.mrb[0].mxu0 %v130
  %v1420 = vpop.f32.mrb[0].mxu0
  %v1421 = vadd.f32 %v1351, %v1420
  %v1422 = vpop.f32.mrb[0].mxu0
  %1423 = vdwg.mxu0
  %1424 = vmatprep.subr.mxu0 0.0
  %1425 = vmatpush1.msra.mxu0 %v494
  %1426 = vmatprep.subr.mxu0 0.0
  %1427 = vmatpush1.msra.mxu0 %v495
  %1428 = vmatprep.subr.mxu0 0.0
  %1429 = vmatpush1.msra.mxu0 %v496
  %1430 = vmatprep.subr.mxu0 0.0
  %1431 = vmatpush1.msra.mxu0 %v497
  %1432 = vmatprep.subr.mxu0 0.0
  %1433 = vmatpush1.msra.mxu0 %v498
  %1434 = vmatprep.subr.mxu0 0.0
  %1435 = vmatpush1.msra.mxu0 %v499
  %1436 = vmatprep.subr.mxu0 0.0
  %1437 = vmatpush1.msra.mxu0 %v500
  %1438 = vmatprep.subr.mxu0 0.0
  %1439 = vmatpush1.msra.mxu0 %v501
  %1440 = vmatprep.subr.mxu0 0.0
  %1441 = vmatpush1.msra.mxu0 %v502
  %1442 = vmatprep.subr.mxu0 0.0
  %1443 = vmatpush1.msra.mxu0 %v503
  %1444 = vmatprep.subr.mxu0 0.0
  %1445 = vmatpush1.msra.mxu0 %v504
  %1446 = vmatprep.subr.mxu0 0.0
  %1447 = vmatpush1.msra.mxu0 %v505
  %1448 = vmatprep.subr.mxu0 0.0
  %1449 = vmatpush1.msra.mxu0 %v506
  %1450 = vmatprep.subr.mxu0 0.0
  %1451 = vmatpush1.msra.mxu0 %v507
  %1452 = vmatprep.subr.mxu0 0.0
  %1453 = vmatpush1.msra.mxu0 %v508
  %1454 = vmatprep.subr.mxu0 0.0
  %1455 = vmatpush1.msra.mxu0 %v509
  %1456 = vmatprep.subr.mxu0 0.0
  %1457 = vmatpush1.msra.mxu0 %v510
  %1458 = vmatprep.subr.mxu0 0.0
  %1459 = vmatpush1.msra.mxu0 %v511
  %1460 = vmatprep.subr.mxu0 0.0
  %1461 = vmatpush1.msra.mxu0 %v512
  %1462 = vmatprep.subr.mxu0 0.0
  %1463 = vmatpush1.msra.mxu0 %v513
  %1464 = vmatprep.subr.mxu0 0.0
  %1465 = vmatpush1.msra.mxu0 %v514
  %1466 = vmatprep.subr.mxu0 0.0
  %1467 = vmatpush1.msra.mxu0 %v515
  %1468 = vmatprep.subr.mxu0 0.0
  %1469 = vmatpush1.msra.mxu0 %v516
  %1470 = vmatprep.subr.mxu0 0.0
  %1471 = vmatpush1.msra.mxu0 %v517
  %1472 = vmatprep.subr.mxu0 0.0
  %1473 = vmatpush1.msra.mxu0 %v518
  %1474 = vmatprep.subr.mxu0 0.0
  %1475 = vmatpush1.msra.mxu0 %v519
  %1476 = vmatprep.subr.mxu0 0.0
  %1477 = vmatpush1.msra.mxu0 %v520
  %1478 = vmatprep.subr.mxu0 0.0
  %1479 = vmatpush1.msra.mxu0 %v521
  %1480 = vmatprep.subr.mxu0 0.0
  %1481 = vmatpush1.msra.mxu0 %v522
  %1482 = vmatprep.subr.mxu0 0.0
  %1483 = vmatpush1.msra.mxu0 %v523
  %1484 = vmatprep.subr.mxu0 0.0
  %1485 = vmatpush1.msra.mxu0 %v524
  %1486 = vmatprep.subr.mxu0 0.0
  %1487 = vmatpush1.msra.mxu0 %v525
  %1488 = vmatprep.mubr.f32.mxu0 %v133
  %1489 = vmatmul.mubr.f32.gmra.mrb[0].mxu0 %v132
  %v1490 = vpop.f32.mrb[0].mxu0
  %v1491 = vadd.f32 %v1421, %v1490
  %v1492 = vpop.f32.mrb[0].mxu0
  %1493 = vdwg.mxu0
  %1494 = vmatprep.subr.mxu0 0.0
  %1495 = vmatpush1.msra.mxu0 %v526
  %1496 = vmatprep.subr.mxu0 0.0
  %1497 = vmatpush1.msra.mxu0 %v527
  %1498 = vmatprep.subr.mxu0 0.0
  %1499 = vmatpush1.msra.mxu0 %v528
  %1500 = vmatprep.subr.mxu0 0.0
  %1501 = vmatpush1.msra.mxu0 %v529
  %1502 = vmatprep.subr.mxu0 0.0
  %1503 = vmatpush1.msra.mxu0 %v530
  %1504 = vmatprep.subr.mxu0 0.0
  %1505 = vmatpush1.msra.mxu0 %v531
  %1506 = vmatprep.subr.mxu0 0.0
  %1507 = vmatpush1.msra.mxu0 %v532
  %1508 = vmatprep.subr.mxu0 0.0
  %1509 = vmatpush1.msra.mxu0 %v533
  %1510 = vmatprep.subr.mxu0 0.0
  %1511 = vmatpush1.msra.mxu0 %v534
  %1512 = vmatprep.subr.mxu0 0.0
  %1513 = vmatpush1.msra.mxu0 %v535
  %1514 = vmatprep.subr.mxu0 0.0
  %1515 = vmatpush1.msra.mxu0 %v536
  %1516 = vmatprep.subr.mxu0 0.0
  %1517 = vmatpush1.msra.mxu0 %v537
  %1518 = vmatprep.subr.mxu0 0.0
  %1519 = vmatpush1.msra.mxu0 %v538
  %1520 = vmatprep.subr.mxu0 0.0
  %1521 = vmatpush1.msra.mxu0 %v539
  %1522 = vmatprep.subr.mxu0 0.0
  %1523 = vmatpush1.msra.mxu0 %v540
  %1524 = vmatprep.subr.mxu0 0.0
  %1525 = vmatpush1.msra.mxu0 %v541
  %1526 = vmatprep.subr.mxu0 0.0
  %1527 = vmatpush1.msra.mxu0 %v542
  %1528 = vmatprep.subr.mxu0 0.0
  %1529 = vmatpush1.msra.mxu0 %v543
  %1530 = vmatprep.subr.mxu0 0.0
  %1531 = vmatpush1.msra.mxu0 %v544
  %1532 = vmatprep.subr.mxu0 0.0
  %1533 = vmatpush1.msra.mxu0 %v545
  %1534 = vmatprep.subr.mxu0 0.0
  %1535 = vmatpush1.msra.mxu0 %v546
  %1536 = vmatprep.subr.mxu0 0.0
  %1537 = vmatpush1.msra.mxu0 %v547
  %1538 = vmatprep.subr.mxu0 0.0
  %1539 = vmatpush1.msra.mxu0 %v548
  %1540 = vmatprep.subr.mxu0 0.0
  %1541 = vmatpush1.msra.mxu0 %v549
  %1542 = vmatprep.subr.mxu0 0.0
  %1543 = vmatpush1.msra.mxu0 %v550
  %1544 = vmatprep.subr.mxu0 0.0
  %1545 = vmatpush1.msra.mxu0 %v551
  %1546 = vmatprep.subr.mxu0 0.0
  %1547 = vmatpush1.msra.mxu0 %v552
  %1548 = vmatprep.subr.mxu0 0.0
  %1549 = vmatpush1.msra.mxu0 %v553
  %1550 = vmatprep.subr.mxu0 0.0
  %1551 = vmatpush1.msra.mxu0 %v554
  %1552 = vmatprep.subr.mxu0 0.0
  %1553 = vmatpush1.msra.mxu0 %v555
  %1554 = vmatprep.subr.mxu0 0.0
  %1555 = vmatpush1.msra.mxu0 %v556
  %1556 = vmatprep.subr.mxu0 0.0
  %1557 = vmatpush1.msra.mxu0 %v557
  %1558 = vmatprep.mubr.f32.mxu0 %v135
  %1559 = vmatmul.mubr.f32.gmra.mrb[0].mxu0 %v134
  %v1560 = vpop.f32.mrb[0].mxu0
  %v1561 = vadd.f32 %v1491, %v1560
  %v1562 = vpop.f32.mrb[0].mxu0
  %1563 = vdwg.mxu0
  %1564 = vmatprep.subr.mxu0 0.0
  %1565 = vmatpush1.msra.mxu0 %v558
  %1566 = vmatprep.subr.mxu0 0.0
  %1567 = vmatpush1.msra.mxu0 %v559
  %1568 = vmatprep.subr.mxu0 0.0
  %1569 = vmatpush1.msra.mxu0 %v560
  %1570 = vmatprep.subr.mxu0 0.0
  %1571 = vmatpush1.msra.mxu0 %v561
  %1572 = vmatprep.subr.mxu0 0.0
  %1573 = vmatpush1.msra.mxu0 %v562
  %1574 = vmatprep.subr.mxu0 0.0
  %1575 = vmatpush1.msra.mxu0 %v563
  %1576 = vmatprep.subr.mxu0 0.0
  %1577 = vmatpush1.msra.mxu0 %v564
  %1578 = vmatprep.subr.mxu0 0.0
  %1579 = vmatpush1.msra.mxu0 %v565
  %1580 = vmatprep.subr.mxu0 0.0
  %1581 = vmatpush1.msra.mxu0 %v566
  %1582 = vmatprep.subr.mxu0 0.0
  %1583 = vmatpush1.msra.mxu0 %v567
  %1584 = vmatprep.subr.mxu0 0.0
  %1585 = vmatpush1.msra.mxu0 %v568
  %1586 = vmatprep.subr.mxu0 0.0
  %1587 = vmatpush1.msra.mxu0 %v569
  %1588 = vmatprep.subr.mxu0 0.0
  %1589 = vmatpush1.msra.mxu0 %v570
  %1590 = vmatprep.subr.mxu0 0.0
  %1591 = vmatpush1.msra.mxu0 %v571
  %1592 = vmatprep.subr.mxu0 0.0
  %1593 = vmatpush1.msra.mxu0 %v572
  %1594 = vmatprep.subr.mxu0 0.0
  %1595 = vmatpush1.msra.mxu0 %v573
  %1596 = vmatprep.subr.mxu0 0.0
  %1597 = vmatpush1.msra.mxu0 %v574
  %1598 = vmatprep.subr.mxu0 0.0
  %1599 = vmatpush1.msra.mxu0 %v575
  %1600 = vmatprep.subr.mxu0 0.0
  %1601 = vmatpush1.msra.mxu0 %v576
  %1602 = vmatprep.subr.mxu0 0.0
  %1603 = vmatpush1.msra.mxu0 %v577
  %1604 = vmatprep.subr.mxu0 0.0
  %1605 = vmatpush1.msra.mxu0 %v578
  %1606 = vmatprep.subr.mxu0 0.0
  %1607 = vmatpush1.msra.mxu0 %v579
  %1608 = vmatprep.subr.mxu0 0.0
  %1609 = vmatpush1.msra.mxu0 %v580
  %1610 = vmatprep.subr.mxu0 0.0
  %1611 = vmatpush1.msra.mxu0 %v581
  %1612 = vmatprep.subr.mxu0 0.0
  %1613 = vmatpush1.msra.mxu0 %v582
  %1614 = vmatprep.subr.mxu0 0.0
  %1615 = vmatpush1.msra.mxu0 %v583
  %1616 = vmatprep.subr.mxu0 0.0
  %1617 = vmatpush1.msra.mxu0 %v584
  %1618 = vmatprep.subr.mxu0 0.0
  %1619 = vmatpush1.msra.mxu0 %v585
  %1620 = vmatprep.subr.mxu0 0.0
  %1621 = vmatpush1.msra.mxu0 %v586
  %1622 = vmatprep.subr.mxu0 0.0
  %1623 = vmatpush1.msra.mxu0 %v587
  %1624 = vmatprep.subr.mxu0 0.0
  %1625 = vmatpush1.msra.mxu0 %v588
  %1626 = vmatprep.subr.mxu0 0.0
  %1627 = vmatpush1.msra.mxu0 %v589
  %1628 = vmatprep.mubr.f32.mxu0 %v137
  %1629 = vmatmul.mubr.f32.gmra.mrb[0].mxu0 %v136
  %v1630 = vpop.f32.mrb[0].mxu0
  %v1631 = vadd.f32 %v1561, %v1630
  %v1632 = vpop.f32.mrb[0].mxu0
  %1633 = vdwg.mxu0
  %1634 = vmatprep.subr.mxu0 0.0
  %1635 = vmatpush1.msra.mxu0 %v590
  %1636 = vmatprep.subr.mxu0 0.0
  %1637 = vmatpush1.msra.mxu0 %v591
  %1638 = vmatprep.subr.mxu0 0.0
  %1639 = vmatpush1.msra.mxu0 %v592
  %1640 = vmatprep.subr.mxu0 0.0
  %1641 = vmatpush1.msra.mxu0 %v593
  %1642 = vmatprep.subr.mxu0 0.0
  %1643 = vmatpush1.msra.mxu0 %v594
  %1644 = vmatprep.subr.mxu0 0.0
  %1645 = vmatpush1.msra.mxu0 %v595
  %1646 = vmatprep.subr.mxu0 0.0
  %1647 = vmatpush1.msra.mxu0 %v596
  %1648 = vmatprep.subr.mxu0 0.0
  %1649 = vmatpush1.msra.mxu0 %v597
  %1650 = vmatprep.subr.mxu0 0.0
  %1651 = vmatpush1.msra.mxu0 %v598
  %1652 = vmatprep.subr.mxu0 0.0
  %1653 = vmatpush1.msra.mxu0 %v599
  %1654 = vmatprep.subr.mxu0 0.0
  %1655 = vmatpush1.msra.mxu0 %v600
  %1656 = vmatprep.subr.mxu0 0.0
  %1657 = vmatpush1.msra.mxu0 %v601
  %1658 = vmatprep.subr.mxu0 0.0
  %1659 = vmatpush1.msra.mxu0 %v602
  %1660 = vmatprep.subr.mxu0 0.0
  %1661 = vmatpush1.msra.mxu0 %v603
  %1662 = vmatprep.subr.mxu0 0.0
  %1663 = vmatpush1.msra.mxu0 %v604
  %1664 = vmatprep.subr.mxu0 0.0
  %1665 = vmatpush1.msra.mxu0 %v605
  %1666 = vmatprep.subr.mxu0 0.0
  %1667 = vmatpush1.msra.mxu0 %v606
  %1668 = vmatprep.subr.mxu0 0.0
  %1669 = vmatpush1.msra.mxu0 %v607
  %1670 = vmatprep.subr.mxu0 0.0
  %1671 = vmatpush1.msra.mxu0 %v608
  %1672 = vmatprep.subr.mxu0 0.0
  %1673 = vmatpush1.msra.mxu0 %v609
  %1674 = vmatprep.subr.mxu0 0.0
  %1675 = vmatpush1.msra.mxu0 %v610
  %1676 = vmatprep.subr.mxu0 0.0
  %1677 = vmatpush1.msra.mxu0 %v611
  %1678 = vmatprep.subr.mxu0 0.0
  %1679 = vmatpush1.msra.mxu0 %v612
  %1680 = vmatprep.subr.mxu0 0.0
  %1681 = vmatpush1.msra.mxu0 %v613
  %1682 = vmatprep.subr.mxu0 0.0
  %1683 = vmatpush1.msra.mxu0 %v614
  %1684 = vmatprep.subr.mxu0 0.0
  %1685 = vmatpush1.msra.mxu0 %v615
  %1686 = vmatprep.subr.mxu0 0.0
  %1687 = vmatpush1.msra.mxu0 %v616
  %1688 = vmatprep.subr.mxu0 0.0
  %1689 = vmatpush1.msra.mxu0 %v617
  %1690 = vmatprep.subr.mxu0 0.0
  %1691 = vmatpush1.msra.mxu0 %v618
  %1692 = vmatprep.subr.mxu0 0.0
  %1693 = vmatpush1.msra.mxu0 %v619
  %1694 = vmatprep.subr.mxu0 0.0
  %1695 = vmatpush1.msra.mxu0 %v620
  %1696 = vmatprep.subr.mxu0 0.0
  %1697 = vmatpush1.msra.mxu0 %v621
  %1698 = vmatprep.mubr.f32.mxu0 %v139
  %1699 = vmatmul.mubr.f32.gmra.mrb[0].mxu0 %v138
  %v1700 = vpop.f32.mrb[0].mxu0
  %v1701 = vadd.f32 %v1631, %v1700
  %v1702 = vpop.f32.mrb[0].mxu0
  %1703 = vdwg.mxu0
  %1704 = vmatprep.subr.mxu0 0.0
  %1705 = vmatpush1.msra.mxu0 %v622
  %1706 = vmatprep.subr.mxu0 0.0
  %1707 = vmatpush1.msra.mxu0 %v623
  %1708 = vmatprep.subr.mxu0 0.0
  %1709 = vmatpush1.msra.mxu0 %v624
  %1710 = vmatprep.subr.mxu0 0.0
  %1711 = vmatpush1.msra.mxu0 %v625
  %1712 = vmatprep.subr.mxu0 0.0
  %1713 = vmatpush1.msra.mxu0 %v626
  %1714 = vmatprep.subr.mxu0 0.0
  %1715 = vmatpush1.msra.mxu0 %v627
  %1716 = vmatprep.subr.mxu0 0.0
  %1717 = vmatpush1.msra.mxu0 %v628
  %1718 = vmatprep.subr.mxu0 0.0
  %1719 = vmatpush1.msra.mxu0 %v629
  %1720 = vmatprep.subr.mxu0 0.0
  %1721 = vmatpush1.msra.mxu0 %v630
  %1722 = vmatprep.subr.mxu0 0.0
  %1723 = vmatpush1.msra.mxu0 %v631
  %1724 = vmatprep.subr.mxu0 0.0
  %1725 = vmatpush1.msra.mxu0 %v632
  %1726 = vmatprep.subr.mxu0 0.0
  %1727 = vmatpush1.msra.mxu0 %v633
  %1728 = vmatprep.subr.mxu0 0.0
  %1729 = vmatpush1.msra.mxu0 %v634
  %1730 = vmatprep.subr.mxu0 0.0
  %1731 = vmatpush1.msra.mxu0 %v635
  %1732 = vmatprep.subr.mxu0 0.0
  %1733 = vmatpush1.msra.mxu0 %v636
  %1734 = vmatprep.subr.mxu0 0.0
  %1735 = vmatpush1.msra.mxu0 %v637
  %1736 = vmatprep.subr.mxu0 0.0
  %1737 = vmatpush1.msra.mxu0 %v638
  %1738 = vmatprep.subr.mxu0 0.0
  %1739 = vmatpush1.msra.mxu0 %v639
  %1740 = vmatprep.subr.mxu0 0.0
  %1741 = vmatpush1.msra.mxu0 %v640
  %1742 = vmatprep.subr.mxu0 0.0
  %1743 = vmatpush1.msra.mxu0 %v641
  %1744 = vmatprep.subr.mxu0 0.0
  %1745 = vmatpush1.msra.mxu0 %v642
  %1746 = vmatprep.subr.mxu0 0.0
  %1747 = vmatpush1.msra.mxu0 %v643
  %1748 = vmatprep.subr.mxu0 0.0
  %1749 = vmatpush1.msra.mxu0 %v644
  %1750 = vmatprep.subr.mxu0 0.0
  %1751 = vmatpush1.msra.mxu0 %v645
  %1752 = vmatprep.subr.mxu0 0.0
  %1753 = vmatpush1.msra.mxu0 %v646
  %1754 = vmatprep.subr.mxu0 0.0
  %1755 = vmatpush1.msra.mxu0 %v647
  %1756 = vmatprep.subr.mxu0 0.0
  %1757 = vmatpush1.msra.mxu0 %v648
  %1758 = vmatprep.subr.mxu0 0.0
  %1759 = vmatpush1.msra.mxu0 %v649
  %1760 = vmatprep.subr.mxu0 0.0
  %1761 = vmatpush1.msra.mxu0 %v650
  %1762 = vmatprep.subr.mxu0 0.0
  %1763 = vmatpush1.msra.mxu0 %v651
  %1764 = vmatprep.subr.mxu0 0.0
  %1765 = vmatpush1.msra.mxu0 %v652
  %1766 = vmatprep.subr.mxu0 0.0
  %1767 = vmatpush1.msra.mxu0 %v653
  %1768 = vmatprep.mubr.f32.mxu0 %v141
  %1769 = vmatmul.mubr.f32.gmra.mrb[0].mxu0 %v140
  %v1770 = vpop.f32.mrb[0].mxu0
  %v1771 = vadd.f32 %v1701, %v1770
  %v1772 = vpop.f32.mrb[0].mxu0
  %1773 = vdwg.mxu0
  %v1774 = vsub.f32 0.0, %v1771
  %v1775 = vmul.f32 %v1774, 1.442695
  %v1776 = vpow.pop %v1775
  %v1777 = vadd.f32 %v1776, 1.0
  %v1778 = vrcp.pop %v1777
  %v1779 = vmul.f32 1.0, %v1778
  %1780 = vst [vmem:[%s3] sm:$0xff] %v1779
  // Predicated region
  $region14: #{puremf_forward.1} parent=0 // pred_check
    _
  $region15: #{puremf_forward.1} parent=0 // pred_check_branch
    %1782 = sbr.rel (0) target = $region17
  $region16: #{puremf_forward.1} parent=0 // pred_region
    _
  $region17: #{puremf_forward.1} parent=0 // pred_fallthru
    _
  // Predicated region
  $region18: #{puremf_forward.1} parent=0 // pred_check
    _
  $region19: #{puremf_forward.1} parent=0 // pred_check_branch
    %1784 = sbr.rel (0) target = $region21
  $region20: #{puremf_forward.1} parent=0 // pred_region
    _
  $region21: #{puremf_forward.1} parent=0 // pred_fallthru
    _

</llo_original>
